<compile_context>
chip_gen: v6e
topology: v6e:2x2x1
jax: 0.10.0
libtpu: 0.0.40
codegen_flags: <defaults>
</compile_context>

<pallas_src>
import functools

import jax
import jax.numpy as jnp
from jax.experimental import pallas as pl
from jax.experimental.pallas import tpu as pltpu


# ---------------------------------------------------------------------------
# Fused single-pass kernel: pool + pooled MLPs + per-pixel MLP + gate.
# ---------------------------------------------------------------------------
def fused_kernel(x_ref,
                 w1a_ref, b1a_ref, w2a_ref, b2a_ref,
                 w1p_ref, b1p_ref, w2p_ref, b2p_ref,
                 w1h_ref, b1h_ref, w2h_ref, b2h_ref,
                 o_ref, *, hw_total):
    inv_hw = 1.0 / hw_total

    def mlp(v, w1, b1, w2, b2):
        # 1x1 conv in channel-first layout == (C_out, C_in) @ (C_in, N).
        h = jnp.dot(w1, v, preferred_element_type=jnp.float32) + b1
        h = jnp.maximum(h, 0.0)                      # ReLU (Dropout = identity)
        return jnp.dot(w2, h, preferred_element_type=jnp.float32) + b2

    # Static unroll over the batch sub-block (Bb is small, compile-time).
    for b in range(x_ref.shape[0]):
        x = x_ref[b].astype(jnp.float32)                       # (C, HW)
        avg = jnp.sum(x, axis=-1, keepdims=True) * inv_hw      # (C, 1)
        mx = jnp.max(x, axis=-1, keepdims=True)                # (C, 1)

        pooled = (mlp(avg, w1a_ref[...], b1a_ref[...], w2a_ref[...], b2a_ref[...])
                  + mlp(mx, w1p_ref[...], b1p_ref[...], w2p_ref[...], b2p_ref[...])
                  + b2h_ref[...])                    # layer3 bias folded in here

        h = jnp.dot(w1h_ref[...], x, preferred_element_type=jnp.float32) + b1h_ref[...]
        h = jnp.maximum(h, 0.0)
        hwo = jnp.dot(w2h_ref[...], h, preferred_element_type=jnp.float32)

        scale = jax.nn.sigmoid(hwo + pooled)                   # (C,1) broadcast
        o_ref[b] = (x * scale).astype(o_ref.dtype)


# ---------------------------------------------------------------------------
# Two-pass path, pass 1: pooled reduction (avg + max over HW) + pooled MLPs.
# ---------------------------------------------------------------------------
def pool_kernel(x_ref,
                w1a_ref, b1a_ref, w2a_ref, b2a_ref,
                w1p_ref, b1p_ref, w2p_ref, b2p_ref,
                b2h_ref,
                pooled_ref,
                sum_sc, max_sc,
                *, hw_total, thw):
    t = pl.program_id(1)
    x = x_ref[...].astype(jnp.float32)                          # (C, tHW)

    @pl.when(t == 0)
    def _():
        sum_sc[...] = jnp.zeros_like(sum_sc)
        max_sc[...] = jnp.full_like(max_sc, -jnp.inf)

    if hw_total % thw != 0:
        # cdiv tiling: mask the padded lanes of the tail tile.
        valid = hw_total - t * thw                 # >= thw except on last tile
        lane = jax.lax.broadcasted_iota(jnp.int32, x.shape, 1)
        in_bounds = lane < valid
        x_sum = jnp.where(in_bounds, x, 0.0)
        x_max = jnp.where(in_bounds, x, -jnp.inf)
    else:
        x_sum = x
        x_max = x

    sum_sc[...] += jnp.sum(x_sum, axis=-1, keepdims=True)       # (C, 1)
    max_sc[...] = jnp.maximum(max_sc[...],
                              jnp.max(x_max, axis=-1, keepdims=True))

    @pl.when(t == pl.num_programs(1) - 1)
    def _():
        avg = sum_sc[...] * (1.0 / hw_total)                    # (C, 1)
        mx = max_sc[...]                                        # (C, 1)

        def mlp(v, w1, b1, w2, b2):
            h = jnp.dot(w1, v, preferred_element_type=jnp.float32) + b1
            h = jnp.maximum(h, 0.0)                  # ReLU (Dropout = identity)
            return jnp.dot(w2, h, preferred_element_type=jnp.float32) + b2

        amp = mlp(avg, w1a_ref[...], b1a_ref[...], w2a_ref[...], b2a_ref[...])
        app = mlp(mx, w1p_ref[...], b1p_ref[...], w2p_ref[...], b2p_ref[...])
        # Fold the layer3 output bias (b2h) into the pooled vector so pass 2
        # skips one broadcast add + one resident input.
        pooled_ref[...] = (amp + app + b2h_ref[...]).astype(pooled_ref.dtype)


# ---------------------------------------------------------------------------
# Two-pass path, pass 2: per-pixel layer3 MLP + sigmoid gate + multiply.
# ---------------------------------------------------------------------------
def apply_kernel(x_ref, pooled_ref,
                 w1h_ref, b1h_ref, w2h_ref,
                 o_ref):
    x = x_ref[...].astype(jnp.float32)                          # (C, tHW)

    h = jnp.dot(w1h_ref[...], x, preferred_element_type=jnp.float32) + b1h_ref[...]
    h = jnp.maximum(h, 0.0)                                     # ReLU
    hwo = jnp.dot(w2h_ref[...], h, preferred_element_type=jnp.float32)

    # b2h is already folded into pooled.
    scale = jax.nn.sigmoid(hwo + pooled_ref[...].astype(jnp.float32))
    o_ref[...] = (x * scale).astype(o_ref.dtype)


# ---------------------------------------------------------------------------
# Wrapper: path/tile selection sized for v5e/v6e/v7x.
# ---------------------------------------------------------------------------
_FUSED_IMAGE_BYTES = 3 << 20   # per-image threshold to take the fused path
_FUSED_BLOCK_BYTES = 4 << 20   # target batch-block size in the fused path
_TILE_BUDGET_BYTES = 4 << 20   # target x-tile size in the two-pass path


def _largest_divisor_leq(n, cap):
    cap = max(1, min(n, cap))
    for d in range(cap, 0, -1):
        if n % d == 0:
            return d
    return 1


def _pick_hw_tile(hw, c, itemsize, budget):
    """Lane tile: full HW if it fits the budget, else a multiple of 128
    sized to ~budget bytes; the tail is handled by cdiv grid + masking."""
    cap = max(128, (budget // max(1, c * itemsize)) // 128 * 128)
    if hw <= cap:
        return hw
    return cap


def _vmem_limit(tile_bytes, weight_bytes):
    # Double-buffered in + out blocks, f32 intermediates, resident weights,
    # plus slack.  Clamp to [32 MiB, 48 MiB]: raises v5e's 16 MiB default
    # scoped limit and stays well under v7x's 64 MiB physical VMEM.
    need = 8 * tile_bytes + weight_bytes + (4 << 20)
    return int(min(max(need, 32 << 20), 48 << 20))


def ecab_pallas(x_nchw, params, *,
                fused_threshold_bytes=_FUSED_IMAGE_BYTES,
                tile_budget_bytes=_TILE_BUDGET_BYTES):
    """x_nchw: [B, C, H, W]. Returns [B, C, H, W] (same dtype as input)."""
    B, C, H, W = x_nchw.shape
    HW = H * W
    x = x_nchw.reshape(B, C, HW)          # free reshape, no transpose
    dtype = x.dtype
    itemsize = dtype.itemsize

    (w1a, b1a, w2a, b2a,
     w1p, b1p, w2p, b2p,
     w1h, b1h, w2h, b2h) = params
    Cr = w1a.shape[0]
    weight_bytes = sum(int(p.size) * p.dtype.itemsize for p in params)

    def wspec(shape):
        # Resident VMEM weight block: full array, constant index map.
        return pl.BlockSpec(shape, lambda *_: (0,) * len(shape))

    img_bytes = C * HW * itemsize

    # ---------------- fused single-pass path --------------------------------
    if img_bytes <= fused_threshold_bytes:
        bb = _largest_divisor_leq(B, max(1, _FUSED_BLOCK_BYTES // max(1, img_bytes)))
        block_bytes = bb * img_bytes
        out = pl.pallas_call(
            functools.partial(fused_kernel, hw_total=HW),
            out_shape=jax.ShapeDtypeStruct((B, C, HW), dtype),
            grid_spec=pltpu.PrefetchScalarGridSpec(
                num_scalar_prefetch=0,
                grid=(B // bb,),
                in_specs=[
                    pl.BlockSpec((bb, C, HW), lambda i: (i, 0, 0)),            # x
                    wspec((Cr, C)), wspec((Cr, 1)), wspec((C, Cr)), wspec((C, 1)),  # AMP
                    wspec((Cr, C)), wspec((Cr, 1)), wspec((C, Cr)), wspec((C, 1)),  # APP
                    wspec((Cr, C)), wspec((Cr, 1)), wspec((C, Cr)), wspec((C, 1)),  # layer3
                ],
                out_specs=pl.BlockSpec((bb, C, HW), lambda i: (i, 0, 0)),
            ),
            compiler_params=pltpu.CompilerParams(
                dimension_semantics=("parallel",),
                vmem_limit_bytes=_vmem_limit(block_bytes, weight_bytes)),
            cost_estimate=pl.CostEstimate(
                flops=4 * B * HW * C * Cr + 8 * B * C * Cr + 2 * B * C * HW,
                transcendentals=B * HW * C,
                bytes_accessed=2 * B * C * HW * itemsize),
        )(x, w1a, b1a, w2a, b2a, w1p, b1p, w2p, b2p, w1h, b1h, w2h, b2h)
        return out.reshape(B, C, H, W)

    # ---------------- two-pass path (large images) --------------------------
    thw = _pick_hw_tile(HW, C, itemsize, tile_budget_bytes)
    n_t = (HW + thw - 1) // thw
    tile_bytes = C * thw * itemsize
    vmem = _vmem_limit(tile_bytes, weight_bytes)

    # Pass 1: pooled reduction + pooled MLPs -> amp + app + b2h per batch.
    # TODO(synk): for B==1 on v7x, split the HW reduction into two parallel
    # halves so the second TensorCore is not idle during this pass.
    pooled = pl.pallas_call(
        functools.partial(pool_kernel, hw_total=HW, thw=thw),
        out_shape=jax.ShapeDtypeStruct((B, C, 1), jnp.float32),
        grid_spec=pltpu.PrefetchScalarGridSpec(
            num_scalar_prefetch=0,
            grid=(B, n_t),
            in_specs=[
                pl.BlockSpec((None, C, thw), lambda b, t: (b, 0, t)),          # x tile
                wspec((Cr, C)), wspec((Cr, 1)), wspec((C, Cr)), wspec((C, 1)),  # AMP
                wspec((Cr, C)), wspec((Cr, 1)), wspec((C, Cr)), wspec((C, 1)),  # APP
                wspec((C, 1)),                                                  # b2h
            ],
            out_specs=pl.BlockSpec((None, C, 1), lambda b, t: (b, 0, 0)),
            scratch_shapes=[pltpu.VMEM((C, 1), jnp.float32),   # running sum
                            pltpu.VMEM((C, 1), jnp.float32)],  # running max
        ),
        compiler_params=pltpu.CompilerParams(
            dimension_semantics=("parallel", "arbitrary"),
            vmem_limit_bytes=vmem),
        cost_estimate=pl.CostEstimate(
            flops=2 * B * C * HW,
            transcendentals=0,
            bytes_accessed=B * C * HW * itemsize),
    )(x, w1a, b1a, w2a, b2a, w1p, b1p, w2p, b2p, b2h)

    # Pass 2: per-pixel layer3 + gate + multiply (fully parallel).
    out = pl.pallas_call(
        apply_kernel,
        out_shape=jax.ShapeDtypeStruct((B, C, HW), dtype),
        grid_spec=pltpu.PrefetchScalarGridSpec(
            num_scalar_prefetch=0,
            grid=(B, n_t),
            in_specs=[
                pl.BlockSpec((None, C, thw), lambda b, t: (b, 0, t)),   # x tile
                pl.BlockSpec((None, C, 1), lambda b, t: (b, 0, 0)),     # pooled
                wspec((Cr, C)), wspec((Cr, 1)), wspec((C, Cr)),         # layer3
            ],
            out_specs=pl.BlockSpec((None, C, thw), lambda b, t: (b, 0, t)),
        ),
        compiler_params=pltpu.CompilerParams(
            dimension_semantics=("parallel", "parallel"),
            vmem_limit_bytes=vmem),
        cost_estimate=pl.CostEstimate(
            flops=4 * B * HW * C * Cr,
            transcendentals=B * HW * C,
            bytes_accessed=2 * B * C * HW * itemsize),
    )(x, pooled, w1h, b1h, w2h)

    return out.reshape(B, C, H, W)


# ---------------------------------------------------------------------------
# Synthetic weights + pure-JAX reference
# ---------------------------------------------------------------------------
def init_params(key, channels, reduction_ratio=4):
    """Conv2d(C_in, C_out, 1) weights stored as [C_out, C_in]; biases as
    [C_out, 1] (channel-first layout)."""
    Cr = channels // reduction_ratio
    keys = jax.random.split(key, 12)
    params = []
    idx = 0
    for _ in range(3):  # AMP, APP, layer3
        w1 = jax.random.normal(keys[idx], (Cr, channels), jnp.float32) * 0.2; idx += 1
        b1 = jax.random.normal(keys[idx], (Cr, 1), jnp.float32) * 0.1; idx += 1
        w2 = jax.random.normal(keys[idx], (channels, Cr), jnp.float32) * 0.2; idx += 1
        b2 = jax.random.normal(keys[idx], (channels, 1), jnp.float32) * 0.1; idx += 1
        params += [w1, b1, w2, b2]
    return tuple(params)


def ecab_ref(x_nchw, params):
    """Pure-JAX reference mirroring the PyTorch forward (eval mode)."""
    (w1a, b1a, w2a, b2a, w1p, b1p, w2p, b2p, w1h, b1h, w2h, b2h) = params
    B, C, H, W = x_nchw.shape
    x = x_nchw.reshape(B, C, H * W)

    def mlp(v, w1, b1, w2, b2):
        h = jnp.einsum('oc,bcn->bon', w1, v) + b1[None]
        h = jnp.maximum(h, 0.0)
        return jnp.einsum('oc,bcn->bon', w2, h) + b2[None]

    avg = jnp.mean(x, axis=-1, keepdims=True)
    mx = jnp.max(x, axis=-1, keepdims=True)
    amp = mlp(avg, w1a, b1a, w2a, b2a)
    app = mlp(mx, w1p, b1p, w2p, b2p)
    hwo = mlp(x, w1h, b1h, w2h, b2h)
    out = x * jax.nn.sigmoid(amp + app + hwo)
    return out.reshape(B, C, H, W)


if __name__ == "__main__":
    key = jax.random.PRNGKey(0)
    kx, kx2, kp = jax.random.split(key, 3)

    B, C = 2, 16                       # channels=16, reduction_ratio=4 -> reduced=4
    params = init_params(kp, C, reduction_ratio=4)

    # 1) Fused single-pass path (default for small images).
    x1 = jax.random.normal(kx, (B, C, 16, 16), jnp.float32)
    out1 = jax.block_until_ready(ecab_pallas(x1, params))
    ref1 = ecab_ref(x1, params)
    assert out1.shape == x1.shape
    assert jnp.allclose(out1, ref1, atol=1e-4, rtol=1e-4), \
        f"fused path max abs err {float(jnp.max(jnp.abs(out1 - ref1)))}"

    # 2) Two-pass path with masked cdiv HW tiling (HW=400, tile=128).
    x2 = jax.random.normal(kx2, (B, C, 20, 20), jnp.float32)
    out2 = jax.block_until_ready(
        ecab_pallas(x2, params,
                    fused_threshold_bytes=0,            # force two-pass path
                    tile_budget_bytes=C * 128 * 4))      # force thw=128 + tail mask
    ref2 = ecab_ref(x2, params)
    assert out2.shape == x2.shape
    assert jnp.allclose(out2, ref2, atol=1e-4, rtol=1e-4), \
        f"two-pass path max abs err {float(jnp.max(jnp.abs(out2 - ref2)))}"

    print("KERNEL_OK")
</pallas_src>

<mosaic_0001>
module attributes {stable_mosaic.version = 11 : i64} {
  func.func @fused_kernel(%arg0: i32, %arg1: memref<2x16x256xf32, #tpu.memory_space<vmem>>, %arg2: memref<4x16xf32, #tpu.memory_space<vmem>>, %arg3: memref<4x1xf32, #tpu.memory_space<vmem>>, %arg4: memref<16x4xf32, #tpu.memory_space<vmem>>, %arg5: memref<16x1xf32, #tpu.memory_space<vmem>>, %arg6: memref<4x16xf32, #tpu.memory_space<vmem>>, %arg7: memref<4x1xf32, #tpu.memory_space<vmem>>, %arg8: memref<16x4xf32, #tpu.memory_space<vmem>>, %arg9: memref<16x1xf32, #tpu.memory_space<vmem>>, %arg10: memref<4x16xf32, #tpu.memory_space<vmem>>, %arg11: memref<4x1xf32, #tpu.memory_space<vmem>>, %arg12: memref<16x4xf32, #tpu.memory_space<vmem>>, %arg13: memref<16x1xf32, #tpu.memory_space<vmem>>, %arg14: memref<2x16x256xf32, #tpu.memory_space<vmem>>) attributes {dimension_semantics = [#tpu.dimension_semantics<parallel>], iteration_bounds = array<i64: 1>, scalar_prefetch = 0 : i64, scratch_operands = 0 : i64, tpu.core_type = #tpu.core_type<tc>, window_params = [{transform_indices = @transform_0, window_bounds = array<i64: 2, 16, 256>}, {pipeline_mode = #tpu.pipeline_mode<synchronous>, transform_indices = @transform_1, window_bounds = array<i64: 4, 16>}, {pipeline_mode = #tpu.pipeline_mode<synchronous>, transform_indices = @transform_2, window_bounds = array<i64: 4, 1>}, {pipeline_mode = #tpu.pipeline_mode<synchronous>, transform_indices = @transform_3, window_bounds = array<i64: 16, 4>}, {pipeline_mode = #tpu.pipeline_mode<synchronous>, transform_indices = @transform_4, window_bounds = array<i64: 16, 1>}, {pipeline_mode = #tpu.pipeline_mode<synchronous>, transform_indices = @transform_5, window_bounds = array<i64: 4, 16>}, {pipeline_mode = #tpu.pipeline_mode<synchronous>, transform_indices = @transform_6, window_bounds = array<i64: 4, 1>}, {pipeline_mode = #tpu.pipeline_mode<synchronous>, transform_indices = @transform_7, window_bounds = array<i64: 16, 4>}, {pipeline_mode = #tpu.pipeline_mode<synchronous>, transform_indices = @transform_8, window_bounds = array<i64: 16, 1>}, {pipeline_mode = #tpu.pipeline_mode<synchronous>, transform_indices = @transform_9, window_bounds = array<i64: 4, 16>}, {pipeline_mode = #tpu.pipeline_mode<synchronous>, transform_indices = @transform_10, window_bounds = array<i64: 4, 1>}, {pipeline_mode = #tpu.pipeline_mode<synchronous>, transform_indices = @transform_11, window_bounds = array<i64: 16, 4>}, {pipeline_mode = #tpu.pipeline_mode<synchronous>, transform_indices = @transform_12, window_bounds = array<i64: 16, 1>}, {transform_indices = @transform_13, window_bounds = array<i64: 2, 16, 256>}]} {
    %c0 = arith.constant 0 : index
    %c0_0 = arith.constant 0 : index
    %c0_1 = arith.constant 0 : index
    %0 = vector.load %arg1[%c0, %c0_0, %c0_1] : memref<2x16x256xf32, #tpu.memory_space<vmem>>, vector<1x16x256xf32>
    %1 = vector.shape_cast %0 : vector<1x16x256xf32> to vector<16x256xf32>
    %cst = arith.constant dense<0.000000e+00> : vector<16xf32>
    %2 = vector.multi_reduction <add>, %1, %cst [1] : vector<16x256xf32> to vector<16xf32>
    %3 = vector.shape_cast %2 : vector<16xf32> to vector<16x1xf32>
    %cst_2 = arith.constant 3.906250e-03 : f32
    %4 = vector.broadcast %cst_2 : f32 to vector<16x1xf32>
    %5 = arith.mulf %3, %4 : vector<16x1xf32>
    %cst_3 = arith.constant dense<0xFF800000> : vector<16xf32>
    %6 = vector.multi_reduction <maximumf>, %1, %cst_3 [1] : vector<16x256xf32> to vector<16xf32>
    %7 = vector.shape_cast %6 : vector<16xf32> to vector<16x1xf32>
    %c0_4 = arith.constant 0 : index
    %c0_5 = arith.constant 0 : index
    %8 = vector.load %arg2[%c0_4, %c0_5] : memref<4x16xf32, #tpu.memory_space<vmem>>, vector<4x16xf32>
    %c0_6 = arith.constant 0 : index
    %c0_7 = arith.constant 0 : index
    %9 = vector.load %arg3[%c0_6, %c0_7] : memref<4x1xf32, #tpu.memory_space<vmem>>, vector<4x1xf32>
    %c0_8 = arith.constant 0 : index
    %c0_9 = arith.constant 0 : index
    %10 = vector.load %arg4[%c0_8, %c0_9] : memref<16x4xf32, #tpu.memory_space<vmem>>, vector<16x4xf32>
    %c0_10 = arith.constant 0 : index
    %c0_11 = arith.constant 0 : index
    %11 = vector.load %arg5[%c0_10, %c0_11] : memref<16x1xf32, #tpu.memory_space<vmem>>, vector<16x1xf32>
    %cst_12 = arith.constant dense<0.000000e+00> : vector<4x1xf32>
    %12 = tpu.matmul %8, %5, %cst_12 {dimension_numbers = #tpu.dot_dimension_numbers<[1], [0], [0], [1], [0, 0, 1, 1], [], []>} : vector<4x16xf32>, vector<16x1xf32>, vector<4x1xf32> -> vector<4x1xf32>
    %13 = arith.addf %12, %9 : vector<4x1xf32>
    %cst_13 = arith.constant 0.000000e+00 : f32
    %14 = vector.broadcast %cst_13 : f32 to vector<4x1xf32>
    %15 = arith.maximumf %13, %14 : vector<4x1xf32>
    %cst_14 = arith.constant dense<0.000000e+00> : vector<16x1xf32>
    %16 = tpu.matmul %10, %15, %cst_14 {dimension_numbers = #tpu.dot_dimension_numbers<[1], [0], [0], [1], [0, 0, 1, 1], [], []>} : vector<16x4xf32>, vector<4x1xf32>, vector<16x1xf32> -> vector<16x1xf32>
    %17 = arith.addf %16, %11 : vector<16x1xf32>
    %c0_15 = arith.constant 0 : index
    %c0_16 = arith.constant 0 : index
    %18 = vector.load %arg6[%c0_15, %c0_16] : memref<4x16xf32, #tpu.memory_space<vmem>>, vector<4x16xf32>
    %c0_17 = arith.constant 0 : index
    %c0_18 = arith.constant 0 : index
    %19 = vector.load %arg7[%c0_17, %c0_18] : memref<4x1xf32, #tpu.memory_space<vmem>>, vector<4x1xf32>
    %c0_19 = arith.constant 0 : index
    %c0_20 = arith.constant 0 : index
    %20 = vector.load %arg8[%c0_19, %c0_20] : memref<16x4xf32, #tpu.memory_space<vmem>>, vector<16x4xf32>
    %c0_21 = arith.constant 0 : index
    %c0_22 = arith.constant 0 : index
    %21 = vector.load %arg9[%c0_21, %c0_22] : memref<16x1xf32, #tpu.memory_space<vmem>>, vector<16x1xf32>
    %cst_23 = arith.constant dense<0.000000e+00> : vector<4x1xf32>
    %22 = tpu.matmul %18, %7, %cst_23 {dimension_numbers = #tpu.dot_dimension_numbers<[1], [0], [0], [1], [0, 0, 1, 1], [], []>} : vector<4x16xf32>, vector<16x1xf32>, vector<4x1xf32> -> vector<4x1xf32>
    %23 = arith.addf %22, %19 : vector<4x1xf32>
    %cst_24 = arith.constant 0.000000e+00 : f32
    %24 = vector.broadcast %cst_24 : f32 to vector<4x1xf32>
    %25 = arith.maximumf %23, %24 : vector<4x1xf32>
    %cst_25 = arith.constant dense<0.000000e+00> : vector<16x1xf32>
    %26 = tpu.matmul %20, %25, %cst_25 {dimension_numbers = #tpu.dot_dimension_numbers<[1], [0], [0], [1], [0, 0, 1, 1], [], []>} : vector<16x4xf32>, vector<4x1xf32>, vector<16x1xf32> -> vector<16x1xf32>
    %27 = arith.addf %26, %21 : vector<16x1xf32>
    %28 = arith.addf %17, %27 : vector<16x1xf32>
    %c0_26 = arith.constant 0 : index
    %c0_27 = arith.constant 0 : index
    %29 = vector.load %arg13[%c0_26, %c0_27] : memref<16x1xf32, #tpu.memory_space<vmem>>, vector<16x1xf32>
    %30 = arith.addf %28, %29 : vector<16x1xf32>
    %c0_28 = arith.constant 0 : index
    %c0_29 = arith.constant 0 : index
    %31 = vector.load %arg10[%c0_28, %c0_29] : memref<4x16xf32, #tpu.memory_space<vmem>>, vector<4x16xf32>
    %cst_30 = arith.constant dense<0.000000e+00> : vector<4x256xf32>
    %32 = tpu.matmul %31, %1, %cst_30 {dimension_numbers = #tpu.dot_dimension_numbers<[1], [0], [0], [1], [0, 0, 1, 1], [], []>} : vector<4x16xf32>, vector<16x256xf32>, vector<4x256xf32> -> vector<4x256xf32>
    %c0_31 = arith.constant 0 : index
    %c0_32 = arith.constant 0 : index
    %33 = vector.load %arg11[%c0_31, %c0_32] : memref<4x1xf32, #tpu.memory_space<vmem>>, vector<4x1xf32>
    %34 = vector.broadcast %33 : vector<4x1xf32> to vector<4x256xf32>
    %35 = arith.addf %32, %34 : vector<4x256xf32>
    %cst_33 = arith.constant 0.000000e+00 : f32
    %36 = vector.broadcast %cst_33 : f32 to vector<4x256xf32>
    %37 = arith.maximumf %35, %36 : vector<4x256xf32>
    %c0_34 = arith.constant 0 : index
    %c0_35 = arith.constant 0 : index
    %38 = vector.load %arg12[%c0_34, %c0_35] : memref<16x4xf32, #tpu.memory_space<vmem>>, vector<16x4xf32>
    %cst_36 = arith.constant dense<0.000000e+00> : vector<16x256xf32>
    %39 = tpu.matmul %38, %37, %cst_36 {dimension_numbers = #tpu.dot_dimension_numbers<[1], [0], [0], [1], [0, 0, 1, 1], [], []>} : vector<16x4xf32>, vector<4x256xf32>, vector<16x256xf32> -> vector<16x256xf32>
    %40 = vector.broadcast %30 : vector<16x1xf32> to vector<16x256xf32>
    %41 = arith.addf %39, %40 : vector<16x256xf32>
    %42 = arith.negf %41 : vector<16x256xf32>
    %43 = math.exp %42 : vector<16x256xf32>
    %cst_37 = arith.constant 1.000000e+00 : f32
    %44 = vector.broadcast %cst_37 : f32 to vector<16x256xf32>
    %45 = arith.addf %44, %43 : vector<16x256xf32>
    %46 = arith.divf %44, %45 : vector<16x256xf32>
    %47 = arith.mulf %1, %46 : vector<16x256xf32>
    %c0_38 = arith.constant 0 : index
    %c0_39 = arith.constant 0 : index
    %c0_40 = arith.constant 0 : index
    %48 = vector.load %arg14[%c0_38, %c0_39, %c0_40] : memref<2x16x256xf32, #tpu.memory_space<vmem>>, vector<1x16x256xf32>
    %49 = vector.shape_cast %48 : vector<1x16x256xf32> to vector<16x256xf32>
    %50 = vector.shape_cast %47 : vector<16x256xf32> to vector<1x16x256xf32>
    tpu.vector_store %arg14[%c0_38, %c0_39, %c0_40], %50 {strides = array<i32>} : memref<2x16x256xf32, #tpu.memory_space<vmem>>, vector<1x16x256xf32>,
    %c1 = arith.constant 1 : index
    %c0_41 = arith.constant 0 : index
    %c0_42 = arith.constant 0 : index
    %51 = vector.load %arg1[%c1, %c0_41, %c0_42] : memref<2x16x256xf32, #tpu.memory_space<vmem>>, vector<1x16x256xf32>
    %52 = vector.shape_cast %51 : vector<1x16x256xf32> to vector<16x256xf32>
    %cst_43 = arith.constant dense<0.000000e+00> : vector<16xf32>
    %53 = vector.multi_reduction <add>, %52, %cst_43 [1] : vector<16x256xf32> to vector<16xf32>
    %54 = vector.shape_cast %53 : vector<16xf32> to vector<16x1xf32>
    %cst_44 = arith.constant 3.906250e-03 : f32
    %55 = vector.broadcast %cst_44 : f32 to vector<16x1xf32>
    %56 = arith.mulf %54, %55 : vector<16x1xf32>
    %cst_45 = arith.constant dense<0xFF800000> : vector<16xf32>
    %57 = vector.multi_reduction <maximumf>, %52, %cst_45 [1] : vector<16x256xf32> to vector<16xf32>
    %58 = vector.shape_cast %57 : vector<16xf32> to vector<16x1xf32>
    %c0_46 = arith.constant 0 : index
    %c0_47 = arith.constant 0 : index
    %59 = vector.load %arg2[%c0_46, %c0_47] : memref<4x16xf32, #tpu.memory_space<vmem>>, vector<4x16xf32>
    %c0_48 = arith.constant 0 : index
    %c0_49 = arith.constant 0 : index
    %60 = vector.load %arg3[%c0_48, %c0_49] : memref<4x1xf32, #tpu.memory_space<vmem>>, vector<4x1xf32>
    %c0_50 = arith.constant 0 : index
    %c0_51 = arith.constant 0 : index
    %61 = vector.load %arg4[%c0_50, %c0_51] : memref<16x4xf32, #tpu.memory_space<vmem>>, vector<16x4xf32>
    %c0_52 = arith.constant 0 : index
    %c0_53 = arith.constant 0 : index
    %62 = vector.load %arg5[%c0_52, %c0_53] : memref<16x1xf32, #tpu.memory_space<vmem>>, vector<16x1xf32>
    %cst_54 = arith.constant dense<0.000000e+00> : vector<4x1xf32>
    %63 = tpu.matmul %59, %56, %cst_54 {dimension_numbers = #tpu.dot_dimension_numbers<[1], [0], [0], [1], [0, 0, 1, 1], [], []>} : vector<4x16xf32>, vector<16x1xf32>, vector<4x1xf32> -> vector<4x1xf32>
    %64 = arith.addf %63, %60 : vector<4x1xf32>
    %cst_55 = arith.constant 0.000000e+00 : f32
    %65 = vector.broadcast %cst_55 : f32 to vector<4x1xf32>
    %66 = arith.maximumf %64, %65 : vector<4x1xf32>
    %cst_56 = arith.constant dense<0.000000e+00> : vector<16x1xf32>
    %67 = tpu.matmul %61, %66, %cst_56 {dimension_numbers = #tpu.dot_dimension_numbers<[1], [0], [0], [1], [0, 0, 1, 1], [], []>} : vector<16x4xf32>, vector<4x1xf32>, vector<16x1xf32> -> vector<16x1xf32>
    %68 = arith.addf %67, %62 : vector<16x1xf32>
    %c0_57 = arith.constant 0 : index
    %c0_58 = arith.constant 0 : index
    %69 = vector.load %arg6[%c0_57, %c0_58] : memref<4x16xf32, #tpu.memory_space<vmem>>, vector<4x16xf32>
    %c0_59 = arith.constant 0 : index
    %c0_60 = arith.constant 0 : index
    %70 = vector.load %arg7[%c0_59, %c0_60] : memref<4x1xf32, #tpu.memory_space<vmem>>, vector<4x1xf32>
    %c0_61 = arith.constant 0 : index
    %c0_62 = arith.constant 0 : index
    %71 = vector.load %arg8[%c0_61, %c0_62] : memref<16x4xf32, #tpu.memory_space<vmem>>, vector<16x4xf32>
    %c0_63 = arith.constant 0 : index
    %c0_64 = arith.constant 0 : index
    %72 = vector.load %arg9[%c0_63, %c0_64] : memref<16x1xf32, #tpu.memory_space<vmem>>, vector<16x1xf32>
    %cst_65 = arith.constant dense<0.000000e+00> : vector<4x1xf32>
    %73 = tpu.matmul %69, %58, %cst_65 {dimension_numbers = #tpu.dot_dimension_numbers<[1], [0], [0], [1], [0, 0, 1, 1], [], []>} : vector<4x16xf32>, vector<16x1xf32>, vector<4x1xf32> -> vector<4x1xf32>
    %74 = arith.addf %73, %70 : vector<4x1xf32>
    %cst_66 = arith.constant 0.000000e+00 : f32
    %75 = vector.broadcast %cst_66 : f32 to vector<4x1xf32>
    %76 = arith.maximumf %74, %75 : vector<4x1xf32>
    %cst_67 = arith.constant dense<0.000000e+00> : vector<16x1xf32>
    %77 = tpu.matmul %71, %76, %cst_67 {dimension_numbers = #tpu.dot_dimension_numbers<[1], [0], [0], [1], [0, 0, 1, 1], [], []>} : vector<16x4xf32>, vector<4x1xf32>, vector<16x1xf32> -> vector<16x1xf32>
    %78 = arith.addf %77, %72 : vector<16x1xf32>
    %79 = arith.addf %68, %78 : vector<16x1xf32>
    %c0_68 = arith.constant 0 : index
    %c0_69 = arith.constant 0 : index
    %80 = vector.load %arg13[%c0_68, %c0_69] : memref<16x1xf32, #tpu.memory_space<vmem>>, vector<16x1xf32>
    %81 = arith.addf %79, %80 : vector<16x1xf32>
    %c0_70 = arith.constant 0 : index
    %c0_71 = arith.constant 0 : index
    %82 = vector.load %arg10[%c0_70, %c0_71] : memref<4x16xf32, #tpu.memory_space<vmem>>, vector<4x16xf32>
    %cst_72 = arith.constant dense<0.000000e+00> : vector<4x256xf32>
    %83 = tpu.matmul %82, %52, %cst_72 {dimension_numbers = #tpu.dot_dimension_numbers<[1], [0], [0], [1], [0, 0, 1, 1], [], []>} : vector<4x16xf32>, vector<16x256xf32>, vector<4x256xf32> -> vector<4x256xf32>
    %c0_73 = arith.constant 0 : index
    %c0_74 = arith.constant 0 : index
    %84 = vector.load %arg11[%c0_73, %c0_74] : memref<4x1xf32, #tpu.memory_space<vmem>>, vector<4x1xf32>
    %85 = vector.broadcast %84 : vector<4x1xf32> to vector<4x256xf32>
    %86 = arith.addf %83, %85 : vector<4x256xf32>
    %cst_75 = arith.constant 0.000000e+00 : f32
    %87 = vector.broadcast %cst_75 : f32 to vector<4x256xf32>
    %88 = arith.maximumf %86, %87 : vector<4x256xf32>
    %c0_76 = arith.constant 0 : index
    %c0_77 = arith.constant 0 : index
    %89 = vector.load %arg12[%c0_76, %c0_77] : memref<16x4xf32, #tpu.memory_space<vmem>>, vector<16x4xf32>
    %cst_78 = arith.constant dense<0.000000e+00> : vector<16x256xf32>
    %90 = tpu.matmul %89, %88, %cst_78 {dimension_numbers = #tpu.dot_dimension_numbers<[1], [0], [0], [1], [0, 0, 1, 1], [], []>} : vector<16x4xf32>, vector<4x256xf32>, vector<16x256xf32> -> vector<16x256xf32>
    %91 = vector.broadcast %81 : vector<16x1xf32> to vector<16x256xf32>
    %92 = arith.addf %90, %91 : vector<16x256xf32>
    %93 = arith.negf %92 : vector<16x256xf32>
    %94 = math.exp %93 : vector<16x256xf32>
    %cst_79 = arith.constant 1.000000e+00 : f32
    %95 = vector.broadcast %cst_79 : f32 to vector<16x256xf32>
    %96 = arith.addf %95, %94 : vector<16x256xf32>
    %97 = arith.divf %95, %96 : vector<16x256xf32>
    %98 = arith.mulf %52, %97 : vector<16x256xf32>
    %c1_80 = arith.constant 1 : index
    %c0_81 = arith.constant 0 : index
    %c0_82 = arith.constant 0 : index
    %99 = vector.load %arg14[%c1_80, %c0_81, %c0_82] : memref<2x16x256xf32, #tpu.memory_space<vmem>>, vector<1x16x256xf32>
    %100 = vector.shape_cast %99 : vector<1x16x256xf32> to vector<16x256xf32>
    %101 = vector.shape_cast %98 : vector<16x256xf32> to vector<1x16x256xf32>
    tpu.vector_store %arg14[%c1_80, %c0_81, %c0_82], %101 {strides = array<i32>} : memref<2x16x256xf32, #tpu.memory_space<vmem>>, vector<1x16x256xf32>,
    return
  }
  func.func @transform_0(%arg0: i32) -> (i32, i32, i32) {
    %c0_i32 = arith.constant 0 : i32
    %c0_i32_0 = arith.constant 0 : i32
    %c0_i32_1 = arith.constant 0 : i32
    return %arg0, %c0_i32, %c0_i32_0 : i32, i32, i32
  }
  func.func @transform_1(%arg0: i32) -> (i32, i32) {
    %c0_i32 = arith.constant 0 : i32
    %c0_i32_0 = arith.constant 0 : i32
    %c0_i32_1 = arith.constant 0 : i32
    return %c0_i32, %c0_i32_0 : i32, i32
  }
  func.func @transform_2(%arg0: i32) -> (i32, i32) {
    %c0_i32 = arith.constant 0 : i32
    %c0_i32_0 = arith.constant 0 : i32
    %c0_i32_1 = arith.constant 0 : i32
    return %c0_i32, %c0_i32_0 : i32, i32
  }
  func.func @transform_3(%arg0: i32) -> (i32, i32) {
    %c0_i32 = arith.constant 0 : i32
    %c0_i32_0 = arith.constant 0 : i32
    %c0_i32_1 = arith.constant 0 : i32
    return %c0_i32, %c0_i32_0 : i32, i32
  }
  func.func @transform_4(%arg0: i32) -> (i32, i32) {
    %c0_i32 = arith.constant 0 : i32
    %c0_i32_0 = arith.constant 0 : i32
    %c0_i32_1 = arith.constant 0 : i32
    return %c0_i32, %c0_i32_0 : i32, i32
  }
  func.func @transform_5(%arg0: i32) -> (i32, i32) {
    %c0_i32 = arith.constant 0 : i32
    %c0_i32_0 = arith.constant 0 : i32
    %c0_i32_1 = arith.constant 0 : i32
    return %c0_i32, %c0_i32_0 : i32, i32
  }
  func.func @transform_6(%arg0: i32) -> (i32, i32) {
    %c0_i32 = arith.constant 0 : i32
    %c0_i32_0 = arith.constant 0 : i32
    %c0_i32_1 = arith.constant 0 : i32
    return %c0_i32, %c0_i32_0 : i32, i32
  }
  func.func @transform_7(%arg0: i32) -> (i32, i32) {
    %c0_i32 = arith.constant 0 : i32
    %c0_i32_0 = arith.constant 0 : i32
    %c0_i32_1 = arith.constant 0 : i32
    return %c0_i32, %c0_i32_0 : i32, i32
  }
  func.func @transform_8(%arg0: i32) -> (i32, i32) {
    %c0_i32 = arith.constant 0 : i32
    %c0_i32_0 = arith.constant 0 : i32
    %c0_i32_1 = arith.constant 0 : i32
    return %c0_i32, %c0_i32_0 : i32, i32
  }
  func.func @transform_9(%arg0: i32) -> (i32, i32) {
    %c0_i32 = arith.constant 0 : i32
    %c0_i32_0 = arith.constant 0 : i32
    %c0_i32_1 = arith.constant 0 : i32
    return %c0_i32, %c0_i32_0 : i32, i32
  }
  func.func @transform_10(%arg0: i32) -> (i32, i32) {
    %c0_i32 = arith.constant 0 : i32
    %c0_i32_0 = arith.constant 0 : i32
    %c0_i32_1 = arith.constant 0 : i32
    return %c0_i32, %c0_i32_0 : i32, i32
  }
  func.func @transform_11(%arg0: i32) -> (i32, i32) {
    %c0_i32 = arith.constant 0 : i32
    %c0_i32_0 = arith.constant 0 : i32
    %c0_i32_1 = arith.constant 0 : i32
    return %c0_i32, %c0_i32_0 : i32, i32
  }
  func.func @transform_12(%arg0: i32) -> (i32, i32) {
    %c0_i32 = arith.constant 0 : i32
    %c0_i32_0 = arith.constant 0 : i32
    %c0_i32_1 = arith.constant 0 : i32
    return %c0_i32, %c0_i32_0 : i32, i32
  }
  func.func @transform_13(%arg0: i32) -> (i32, i32, i32) {
    %c0_i32 = arith.constant 0 : i32
    %c0_i32_0 = arith.constant 0 : i32
    %c0_i32_1 = arith.constant 0 : i32
    return %arg0, %c0_i32, %c0_i32_0 : i32, i32, i32
  }
}

</mosaic_0001>

<llo_original>
// kernel: tpu_custom_call.1
$region0: #{tpu_custom_call.1}
  #allocation0 [shape = 'u32[]', space=smem, size = 0x4, offset = 0x4, fixed_abs, tag = 'smem constant byte address 0x4 - core index']
  #allocation1 [shape = 'u32[144,128]{1,0:T(1,128)}', space=vmem, size = 0x12000, scoped, tag = 'internal scratch']
  %s0 = inlined_call_operand.vmem [shape: f32[2,16,256], index: 0, kind: input, shape index: {}]
  %s1 = inlined_call_operand.vmem [shape: f32[4,16], index: 1, kind: input, shape index: {}]
  %s2 = inlined_call_operand.vmem [shape: f32[4,1], index: 2, kind: input, shape index: {}]
  %s3 = inlined_call_operand.vmem [shape: f32[16,4], index: 3, kind: input, shape index: {}]
  %s4 = inlined_call_operand.vmem [shape: f32[16,1], index: 4, kind: input, shape index: {}]
  %s5 = inlined_call_operand.vmem [shape: f32[4,16], index: 5, kind: input, shape index: {}]
  %s6 = inlined_call_operand.vmem [shape: f32[4,1], index: 6, kind: input, shape index: {}]
  %s7 = inlined_call_operand.vmem [shape: f32[16,4], index: 7, kind: input, shape index: {}]
  %s8 = inlined_call_operand.vmem [shape: f32[16,1], index: 8, kind: input, shape index: {}]
  %s9 = inlined_call_operand.vmem [shape: f32[4,16], index: 9, kind: input, shape index: {}]
  %s10 = inlined_call_operand.vmem [shape: f32[4,1], index: 10, kind: input, shape index: {}]
  %s11 = inlined_call_operand.vmem [shape: f32[16,4], index: 11, kind: input, shape index: {}]
  %s12 = inlined_call_operand.vmem [shape: f32[16,1], index: 12, kind: input, shape index: {}]
  %s13 = inlined_call_operand.hbm [shape: f32[2,16,256], index: 13, kind: output, shape index: {}]
  %s14 = sld [smem:[#allocation0]]
  $region62: #{tpu_custom_call.1} parent=0
    _
  %s16 = ssub.s32 1, %s14
  %s17 = scalar_select 0, %s16, %s14
  $region1: #{tpu_custom_call.1} parent=0
    #allocation2 [shape = 'u8[32768]{0}', space=vmem, size = 0x8000, scoped, tag = 'output window, operand 0, single buffered']
    #allocation3 [shape = 's32[1]{0}', space=sflag, size = 0x4, scoped, tag = 'scoped memory for tpu_custom_call.1']
    %18 = vsyncpa [#allocation3], 0
    // Predicated region
    $region2: #{tpu_custom_call.1} parent=1 // pred_check
      _
    $region3: #{tpu_custom_call.1} parent=1 // pred_check_branch
      %20 = sbr.rel (0) target = $region5
    $region4: #{tpu_custom_call.1} parent=1 // pred_region
      _
    $region5: #{tpu_custom_call.1} parent=1 // pred_fallthru
      _
    // Predicated region
    $region6: #{tpu_custom_call.1} parent=1 // pred_check
      _
    $region7: #{tpu_custom_call.1} parent=1 // pred_check_branch
      %22 = sbr.rel (0) target = $region9
    $region8: #{tpu_custom_call.1} parent=1 // pred_region
      _
    $region9: #{tpu_custom_call.1} parent=1 // pred_fallthru
      _
    // Predicated region
    $region10: #{tpu_custom_call.1} parent=1 // pred_check
      _
    $region11: #{tpu_custom_call.1} parent=1 // pred_check_branch
      %24 = sbr.rel (0) target = $region13
    $region12: #{tpu_custom_call.1} parent=1 // pred_region
      _
    $region13: #{tpu_custom_call.1} parent=1 // pred_fallthru
      _
    // Predicated region
    $region14: #{tpu_custom_call.1} parent=1 // pred_check
      _
    $region15: #{tpu_custom_call.1} parent=1 // pred_check_branch
      %26 = sbr.rel (0) target = $region17
    $region16: #{tpu_custom_call.1} parent=1 // pred_region
      _
    $region17: #{tpu_custom_call.1} parent=1 // pred_fallthru
      _
    // Predicated region
    $region18: #{tpu_custom_call.1} parent=1 // pred_check
      _
    $region19: #{tpu_custom_call.1} parent=1 // pred_check_branch
      %28 = sbr.rel (0) target = $region21
    $region20: #{tpu_custom_call.1} parent=1 // pred_region
      _
    $region21: #{tpu_custom_call.1} parent=1 // pred_fallthru
      _
    // Predicated region
    $region22: #{tpu_custom_call.1} parent=1 // pred_check
      _
    $region23: #{tpu_custom_call.1} parent=1 // pred_check_branch
      %30 = sbr.rel (0) target = $region25
    $region24: #{tpu_custom_call.1} parent=1 // pred_region
      _
    $region25: #{tpu_custom_call.1} parent=1 // pred_fallthru
      _
    // Predicated region
    $region26: #{tpu_custom_call.1} parent=1 // pred_check
      _
    $region27: #{tpu_custom_call.1} parent=1 // pred_check_branch
      %32 = sbr.rel (0) target = $region29
    $region28: #{tpu_custom_call.1} parent=1 // pred_region
      _
    $region29: #{tpu_custom_call.1} parent=1 // pred_fallthru
      _
    // Predicated region
    $region30: #{tpu_custom_call.1} parent=1 // pred_check
      _
    $region31: #{tpu_custom_call.1} parent=1 // pred_check_branch
      %34 = sbr.rel (0) target = $region33
    $region32: #{tpu_custom_call.1} parent=1 // pred_region
      _
    $region33: #{tpu_custom_call.1} parent=1 // pred_fallthru
      _
    // Predicated region
    $region34: #{tpu_custom_call.1} parent=1 // pred_check
      _
    $region35: #{tpu_custom_call.1} parent=1 // pred_check_branch
      %36 = sbr.rel (0) target = $region37
    $region36: #{tpu_custom_call.1} parent=1 // pred_region
      _
    $region37: #{tpu_custom_call.1} parent=1 // pred_fallthru
      _
    // Predicated region
    $region38: #{tpu_custom_call.1} parent=1 // pred_check
      _
    $region39: #{tpu_custom_call.1} parent=1 // pred_check_branch
      %38 = sbr.rel (0) target = $region41
    $region40: #{tpu_custom_call.1} parent=1 // pred_region
      _
    $region41: #{tpu_custom_call.1} parent=1 // pred_fallthru
      _
    // Predicated region
    $region42: #{tpu_custom_call.1} parent=1 // pred_check
      _
    $region43: #{tpu_custom_call.1} parent=1 // pred_check_branch
      %40 = sbr.rel (0) target = $region45
    $region44: #{tpu_custom_call.1} parent=1 // pred_region
      _
    $region45: #{tpu_custom_call.1} parent=1 // pred_fallthru
      _
    // Predicated region
    $region46: #{tpu_custom_call.1} parent=1 // pred_check
      _
    $region47: #{tpu_custom_call.1} parent=1 // pred_check_branch
      %42 = sbr.rel (0) target = $region49
    $region48: #{tpu_custom_call.1} parent=1 // pred_region
      _
    $region49: #{tpu_custom_call.1} parent=1 // pred_fallthru
      _
    // Predicated region
    $region50: #{tpu_custom_call.1} parent=1 // pred_check
      _
    $region51: #{tpu_custom_call.1} parent=1 // pred_check_branch
      %44 = sbr.rel (0) target = $region53
    $region52: #{tpu_custom_call.1} parent=1 // pred_region
      _
    $region53: #{tpu_custom_call.1} parent=1 // pred_fallthru
      _
    %v45 = vld [vmem:[%s0] sm:$0xff]
    %v46 = vld [vmem:[%s0 + $0x8] sm:$0xff]
    %v47 = vld [vmem:[%s0 + $0x10] sm:$0xff]
    %v48 = vld [vmem:[%s0 + $0x18] sm:$0xff]
    %v49 = vadd.f32 %v45, %v46
    %50 = vadd.xlane.f32.xlu0 %v49
    %v51 = vpop.xlane.xlu0 %50
    %v52 = vadd.f32 %v47, %v48
    %53 = vadd.xlane.f32.xlu0 %v52
    %v54 = vpop.xlane.xlu0 %53
    %v55 = vmul.f32 %v51, 0.00390625
    %v56 = vmul.f32 %v54, 0.00390625
    %v57 = vmax.f32 %v45, %v46
    %58 = vmax.xlane.f32.xlu0 %v57
    %v59 = vpop.xlane.xlu0 %58
    %v60 = vmax.f32 %v47, %v48
    %61 = vmax.xlane.f32.xlu0 %v60
    %v62 = vpop.xlane.xlu0 %61
    %v63 = vld [vmem:[%s1] sm:$0xf]
    %v64 = vld [vmem:[%s2] sm:$0xf]
    %v65 = vld [vmem:[%s3] sm:$0xff]
    %v66 = vld [vmem:[%s3 + $0x8] sm:$0xff]
    %v67 = vld [vmem:[%s4] sm:$0xff]
    %v68 = vld [vmem:[%s4 + $0x8] sm:$0xff]
    %vm69 = vcmask 130048
    %v71 = vsel %vm69, %v63, 0
    %73 = vmatprep.subr.mxu0 0.0
    %74 = vmatpush1.msra.mxu0 0.0
    %75 = vmatprep.subr.mxu0 0.0
    %76 = vmatpush1.msra.mxu0 0.0
    %77 = vmatprep.subr.mxu0 0.0
    %78 = vmatpush1.msra.mxu0 0.0
    %79 = vmatprep.subr.mxu0 0.0
    %80 = vmatpush1.msra.mxu0 0.0
    %81 = vmatprep.subr.mxu0 0.0
    %82 = vmatpush1.msra.mxu0 0.0
    %83 = vmatprep.subr.mxu0 0.0
    %84 = vmatpush1.msra.mxu0 0.0
    %85 = vmatprep.subr.mxu0 0.0
    %86 = vmatpush1.msra.mxu0 0.0
    %87 = vmatprep.subr.mxu0 0.0
    %88 = vmatpush1.msra.mxu0 0.0
    %89 = vmatprep.subr.mxu0 0.0
    %90 = vmatpush1.msra.mxu0 0.0
    %91 = vmatprep.subr.mxu0 0.0
    %92 = vmatpush1.msra.mxu0 0.0
    %93 = vmatprep.subr.mxu0 0.0
    %94 = vmatpush1.msra.mxu0 0.0
    %95 = vmatprep.subr.mxu0 0.0
    %96 = vmatpush1.msra.mxu0 0.0
    %97 = vmatprep.subr.mxu0 0.0
    %98 = vmatpush1.msra.mxu0 0.0
    %99 = vmatprep.subr.mxu0 0.0
    %100 = vmatpush1.msra.mxu0 0.0
    %101 = vmatprep.subr.mxu0 0.0
    %102 = vmatpush1.msra.mxu0 %v56
    %103 = vmatprep.subr.mxu0 0.0
    %104 = vmatpush1.msra.mxu0 %v55
    %105 = vmatprep.subr.mxu0 0.0
    %106 = vmatpush2.msra.mxu0 0.0
    %107 = vmatprep.subr.mxu0 0.0
    %108 = vmatpush2.msra.mxu0 0.0
    %109 = vmatprep.subr.mxu0 0.0
    %110 = vmatpush2.msra.mxu0 0.0
    %111 = vmatprep.subr.mxu0 0.0
    %112 = vmatpush2.msra.mxu0 0.0
    %113 = vmatprep.subr.mxu0 0.0
    %114 = vmatpush2.msra.mxu0 0.0
    %115 = vmatprep.subr.mxu0 0.0
    %116 = vmatpush2.msra.mxu0 0.0
    %117 = vmatprep.subr.mxu0 0.0
    %118 = vmatpush2.msra.mxu0 0.0
    %119 = vmatprep.subr.mxu0 0.0
    %120 = vmatpush2.msra.mxu0 0.0
    %121 = vmatprep.subr.mxu0 0.0
    %122 = vmatpush2.msra.mxu0 0.0
    %123 = vmatprep.subr.mxu0 0.0
    %124 = vmatpush2.msra.mxu0 0.0
    %125 = vmatprep.subr.mxu0 0.0
    %126 = vmatpush2.msra.mxu0 0.0
    %127 = vmatprep.subr.mxu0 0.0
    %128 = vmatpush2.msra.mxu0 0.0
    %129 = vmatprep.subr.mxu0 0.0
    %130 = vmatpush2.msra.mxu0 0.0
    %131 = vmatprep.subr.mxu0 0.0
    %132 = vmatpush2.msra.mxu0 0.0
    %133 = vmatprep.subr.mxu0 0.0
    %134 = vmatpush2.msra.mxu0 0.0
    %135 = vmatprep.subr.mxu0 0.0
    %136 = vmatpush2.msra.mxu0 0.0
    %137 = vmatprep.mubr.f32.mxu0 0.0
    %138 = vmatmul.mubr.f32.gmra.mxu0 %v71
    %v139 = vpop.f32.mrf.mxu0
    %v140 = vadd.f32 %v64, %v139
    %v141 = vpop.f32.mrf.mxu0
    %142 = vdwg.mxu0
    %v143 = vmax.f32 %v140, 0.0
    %vm144 = vcmask 31744
    %v146 = vsel %vm144, %v65, 0
    %v149 = vsel %vm144, %v66, 0
    %vm151 = vcmask 1043456
    %v153 = vsel %vm151, %v143, 0
    %155 = vmatprep.subr.mxu0 0.0
    %156 = vmatpush1.msra.mxu0 0.0
    %157 = vmatprep.subr.mxu0 0.0
    %158 = vmatpush1.msra.mxu0 0.0
    %159 = vmatprep.subr.mxu0 0.0
    %160 = vmatpush1.msra.mxu0 0.0
    %161 = vmatprep.subr.mxu0 0.0
    %162 = vmatpush1.msra.mxu0 0.0
    %163 = vmatprep.subr.mxu0 0.0
    %164 = vmatpush1.msra.mxu0 0.0
    %165 = vmatprep.subr.mxu0 0.0
    %166 = vmatpush1.msra.mxu0 0.0
    %167 = vmatprep.subr.mxu0 0.0
    %168 = vmatpush1.msra.mxu0 0.0
    %169 = vmatprep.subr.mxu0 0.0
    %170 = vmatpush1.msra.mxu0 0.0
    %171 = vmatprep.subr.mxu0 0.0
    %172 = vmatpush1.msra.mxu0 0.0
    %173 = vmatprep.subr.mxu0 0.0
    %174 = vmatpush1.msra.mxu0 0.0
    %175 = vmatprep.subr.mxu0 0.0
    %176 = vmatpush1.msra.mxu0 0.0
    %177 = vmatprep.subr.mxu0 0.0
    %178 = vmatpush1.msra.mxu0 0.0
    %179 = vmatprep.subr.mxu0 0.0
    %180 = vmatpush1.msra.mxu0 0.0
    %181 = vmatprep.subr.mxu0 0.0
    %182 = vmatpush1.msra.mxu0 0.0
    %183 = vmatprep.subr.mxu0 0.0
    %184 = vmatpush1.msra.mxu0 0.0
    %185 = vmatprep.subr.mxu0 0.0
    %186 = vmatpush1.msra.mxu0 %v153
    %187 = vmatprep.subr.mxu0 0.0
    %188 = vmatpush2.msra.mxu0 0.0
    %189 = vmatprep.subr.mxu0 0.0
    %190 = vmatpush2.msra.mxu0 0.0
    %191 = vmatprep.subr.mxu0 0.0
    %192 = vmatpush2.msra.mxu0 0.0
    %193 = vmatprep.subr.mxu0 0.0
    %194 = vmatpush2.msra.mxu0 0.0
    %195 = vmatprep.subr.mxu0 0.0
    %196 = vmatpush2.msra.mxu0 0.0
    %197 = vmatprep.subr.mxu0 0.0
    %198 = vmatpush2.msra.mxu0 0.0
    %199 = vmatprep.subr.mxu0 0.0
    %200 = vmatpush2.msra.mxu0 0.0
    %201 = vmatprep.subr.mxu0 0.0
    %202 = vmatpush2.msra.mxu0 0.0
    %203 = vmatprep.subr.mxu0 0.0
    %204 = vmatpush2.msra.mxu0 0.0
    %205 = vmatprep.subr.mxu0 0.0
    %206 = vmatpush2.msra.mxu0 0.0
    %207 = vmatprep.subr.mxu0 0.0
    %208 = vmatpush2.msra.mxu0 0.0
    %209 = vmatprep.subr.mxu0 0.0
    %210 = vmatpush2.msra.mxu0 0.0
    %211 = vmatprep.subr.mxu0 0.0
    %212 = vmatpush2.msra.mxu0 0.0
    %213 = vmatprep.subr.mxu0 0.0
    %214 = vmatpush2.msra.mxu0 0.0
    %215 = vmatprep.subr.mxu0 0.0
    %216 = vmatpush2.msra.mxu0 0.0
    %217 = vmatprep.subr.mxu0 0.0
    %218 = vmatpush2.msra.mxu0 0.0
    %219 = vmatprep.mubr.f32.mxu0 0.0
    %220 = vmatmul.mubr.f32.gmra.mxu0 %v146
    %v221 = vpop.f32.mrf.mxu0
    %v222 = vadd.f32 %v67, %v221
    %v223 = vpop.f32.mrf.mxu0
    %224 = vmatprep.mubr.f32.mxu0 0.0
    %225 = vmatmul.mubr.f32.gmra.mxu0 %v149
    %v226 = vpop.f32.mrf.mxu0
    %v227 = vadd.f32 %v68, %v226
    %v228 = vpop.f32.mrf.mxu0
    %229 = vdwg.mxu0
    %v230 = vld [vmem:[%s5] sm:$0xf]
    %v231 = vld [vmem:[%s6] sm:$0xf]
    %v232 = vld [vmem:[%s7] sm:$0xff]
    %v233 = vld [vmem:[%s7 + $0x8] sm:$0xff]
    %v234 = vld [vmem:[%s8] sm:$0xff]
    %v235 = vld [vmem:[%s8 + $0x8] sm:$0xff]
    %v237 = vsel %vm69, %v230, 0
    %239 = vmatprep.subr.mxu0 0.0
    %240 = vmatpush1.msra.mxu0 0.0
    %241 = vmatprep.subr.mxu0 0.0
    %242 = vmatpush1.msra.mxu0 0.0
    %243 = vmatprep.subr.mxu0 0.0
    %244 = vmatpush1.msra.mxu0 0.0
    %245 = vmatprep.subr.mxu0 0.0
    %246 = vmatpush1.msra.mxu0 0.0
    %247 = vmatprep.subr.mxu0 0.0
    %248 = vmatpush1.msra.mxu0 0.0
    %249 = vmatprep.subr.mxu0 0.0
    %250 = vmatpush1.msra.mxu0 0.0
    %251 = vmatprep.subr.mxu0 0.0
    %252 = vmatpush1.msra.mxu0 0.0
    %253 = vmatprep.subr.mxu0 0.0
    %254 = vmatpush1.msra.mxu0 0.0
    %255 = vmatprep.subr.mxu0 0.0
    %256 = vmatpush1.msra.mxu0 0.0
    %257 = vmatprep.subr.mxu0 0.0
    %258 = vmatpush1.msra.mxu0 0.0
    %259 = vmatprep.subr.mxu0 0.0
    %260 = vmatpush1.msra.mxu0 0.0
    %261 = vmatprep.subr.mxu0 0.0
    %262 = vmatpush1.msra.mxu0 0.0
    %263 = vmatprep.subr.mxu0 0.0
    %264 = vmatpush1.msra.mxu0 0.0
    %265 = vmatprep.subr.mxu0 0.0
    %266 = vmatpush1.msra.mxu0 0.0
    %267 = vmatprep.subr.mxu0 0.0
    %268 = vmatpush1.msra.mxu0 %v62
    %269 = vmatprep.subr.mxu0 0.0
    %270 = vmatpush1.msra.mxu0 %v59
    %271 = vmatprep.subr.mxu0 0.0
    %272 = vmatpush2.msra.mxu0 0.0
    %273 = vmatprep.subr.mxu0 0.0
    %274 = vmatpush2.msra.mxu0 0.0
    %275 = vmatprep.subr.mxu0 0.0
    %276 = vmatpush2.msra.mxu0 0.0
    %277 = vmatprep.subr.mxu0 0.0
    %278 = vmatpush2.msra.mxu0 0.0
    %279 = vmatprep.subr.mxu0 0.0
    %280 = vmatpush2.msra.mxu0 0.0
    %281 = vmatprep.subr.mxu0 0.0
    %282 = vmatpush2.msra.mxu0 0.0
    %283 = vmatprep.subr.mxu0 0.0
    %284 = vmatpush2.msra.mxu0 0.0
    %285 = vmatprep.subr.mxu0 0.0
    %286 = vmatpush2.msra.mxu0 0.0
    %287 = vmatprep.subr.mxu0 0.0
    %288 = vmatpush2.msra.mxu0 0.0
    %289 = vmatprep.subr.mxu0 0.0
    %290 = vmatpush2.msra.mxu0 0.0
    %291 = vmatprep.subr.mxu0 0.0
    %292 = vmatpush2.msra.mxu0 0.0
    %293 = vmatprep.subr.mxu0 0.0
    %294 = vmatpush2.msra.mxu0 0.0
    %295 = vmatprep.subr.mxu0 0.0
    %296 = vmatpush2.msra.mxu0 0.0
    %297 = vmatprep.subr.mxu0 0.0
    %298 = vmatpush2.msra.mxu0 0.0
    %299 = vmatprep.subr.mxu0 0.0
    %300 = vmatpush2.msra.mxu0 0.0
    %301 = vmatprep.subr.mxu0 0.0
    %302 = vmatpush2.msra.mxu0 0.0
    %303 = vmatprep.mubr.f32.mxu0 0.0
    %304 = vmatmul.mubr.f32.gmra.mxu0 %v237
    %v305 = vpop.f32.mrf.mxu0
    %v306 = vadd.f32 %v231, %v305
    %v307 = vpop.f32.mrf.mxu0
    %308 = vdwg.mxu0
    %v309 = vmax.f32 %v306, 0.0
    %v311 = vsel %vm144, %v232, 0
    %v314 = vsel %vm144, %v233, 0
    %v317 = vsel %vm151, %v309, 0
    %319 = vmatprep.subr.mxu0 0.0
    %320 = vmatpush1.msra.mxu0 0.0
    %321 = vmatprep.subr.mxu0 0.0
    %322 = vmatpush1.msra.mxu0 0.0
    %323 = vmatprep.subr.mxu0 0.0
    %324 = vmatpush1.msra.mxu0 0.0
    %325 = vmatprep.subr.mxu0 0.0
    %326 = vmatpush1.msra.mxu0 0.0
    %327 = vmatprep.subr.mxu0 0.0
    %328 = vmatpush1.msra.mxu0 0.0
    %329 = vmatprep.subr.mxu0 0.0
    %330 = vmatpush1.msra.mxu0 0.0
    %331 = vmatprep.subr.mxu0 0.0
    %332 = vmatpush1.msra.mxu0 0.0
    %333 = vmatprep.subr.mxu0 0.0
    %334 = vmatpush1.msra.mxu0 0.0
    %335 = vmatprep.subr.mxu0 0.0
    %336 = vmatpush1.msra.mxu0 0.0
    %337 = vmatprep.subr.mxu0 0.0
    %338 = vmatpush1.msra.mxu0 0.0
    %339 = vmatprep.subr.mxu0 0.0
    %340 = vmatpush1.msra.mxu0 0.0
    %341 = vmatprep.subr.mxu0 0.0
    %342 = vmatpush1.msra.mxu0 0.0
    %343 = vmatprep.subr.mxu0 0.0
    %344 = vmatpush1.msra.mxu0 0.0
    %345 = vmatprep.subr.mxu0 0.0
    %346 = vmatpush1.msra.mxu0 0.0
    %347 = vmatprep.subr.mxu0 0.0
    %348 = vmatpush1.msra.mxu0 0.0
    %349 = vmatprep.subr.mxu0 0.0
    %350 = vmatpush1.msra.mxu0 %v317
    %351 = vmatprep.subr.mxu0 0.0
    %352 = vmatpush2.msra.mxu0 0.0
    %353 = vmatprep.subr.mxu0 0.0
    %354 = vmatpush2.msra.mxu0 0.0
    %355 = vmatprep.subr.mxu0 0.0
    %356 = vmatpush2.msra.mxu0 0.0
    %357 = vmatprep.subr.mxu0 0.0
    %358 = vmatpush2.msra.mxu0 0.0
    %359 = vmatprep.subr.mxu0 0.0
    %360 = vmatpush2.msra.mxu0 0.0
    %361 = vmatprep.subr.mxu0 0.0
    %362 = vmatpush2.msra.mxu0 0.0
    %363 = vmatprep.subr.mxu0 0.0
    %364 = vmatpush2.msra.mxu0 0.0
    %365 = vmatprep.subr.mxu0 0.0
    %366 = vmatpush2.msra.mxu0 0.0
    %367 = vmatprep.subr.mxu0 0.0
    %368 = vmatpush2.msra.mxu0 0.0
    %369 = vmatprep.subr.mxu0 0.0
    %370 = vmatpush2.msra.mxu0 0.0
    %371 = vmatprep.subr.mxu0 0.0
    %372 = vmatpush2.msra.mxu0 0.0
    %373 = vmatprep.subr.mxu0 0.0
    %374 = vmatpush2.msra.mxu0 0.0
    %375 = vmatprep.subr.mxu0 0.0
    %376 = vmatpush2.msra.mxu0 0.0
    %377 = vmatprep.subr.mxu0 0.0
    %378 = vmatpush2.msra.mxu0 0.0
    %379 = vmatprep.subr.mxu0 0.0
    %380 = vmatpush2.msra.mxu0 0.0
    %381 = vmatprep.subr.mxu0 0.0
    %382 = vmatpush2.msra.mxu0 0.0
    %383 = vmatprep.mubr.f32.mxu0 0.0
    %384 = vmatmul.mubr.f32.gmra.mxu0 %v311
    %v385 = vpop.f32.mrf.mxu0
    %v386 = vadd.f32 %v234, %v385
    %v387 = vpop.f32.mrf.mxu0
    %388 = vmatprep.mubr.f32.mxu0 0.0
    %389 = vmatmul.mubr.f32.gmra.mxu0 %v314
    %v390 = vpop.f32.mrf.mxu0
    %v391 = vadd.f32 %v235, %v390
    %v392 = vpop.f32.mrf.mxu0
    %393 = vdwg.mxu0
    %v394 = vadd.f32 %v222, %v386
    %v395 = vadd.f32 %v227, %v391
    %v396 = vld [vmem:[%s12] sm:$0xff]
    %v397 = vld [vmem:[%s12 + $0x8] sm:$0xff]
    %v398 = vadd.f32 %v394, %v396
    %v399 = vadd.f32 %v395, %v397
    %v400 = vld [vmem:[%s9] sm:$0xf]
    %v401 = vld [vmem:[%s10] sm:$0xf]
    %403 = vset.pattern.permute.xlu0 0
    %404 = vperm.xlu0 %403, %v401
    %v405 = vpop.permute.xlu0 %404
    %v408 = vsel %vm69, %v400, 0
    %410 = vmatprep.subr.mxu0 0.0
    %411 = vmatpush1.msra.mxu0 0.0
    %412 = vmatprep.subr.mxu0 0.0
    %413 = vmatpush1.msra.mxu0 0.0
    %414 = vmatprep.subr.mxu0 0.0
    %415 = vmatpush1.msra.mxu0 0.0
    %416 = vmatprep.subr.mxu0 0.0
    %417 = vmatpush1.msra.mxu0 0.0
    %418 = vmatprep.subr.mxu0 0.0
    %419 = vmatpush1.msra.mxu0 0.0
    %420 = vmatprep.subr.mxu0 0.0
    %421 = vmatpush1.msra.mxu0 0.0
    %422 = vmatprep.subr.mxu0 0.0
    %423 = vmatpush1.msra.mxu0 0.0
    %424 = vmatprep.subr.mxu0 0.0
    %425 = vmatpush1.msra.mxu0 0.0
    %426 = vmatprep.subr.mxu0 0.0
    %427 = vmatpush1.msra.mxu0 0.0
    %428 = vmatprep.subr.mxu0 0.0
    %429 = vmatpush1.msra.mxu0 0.0
    %430 = vmatprep.subr.mxu0 0.0
    %431 = vmatpush1.msra.mxu0 0.0
    %432 = vmatprep.subr.mxu0 0.0
    %433 = vmatpush1.msra.mxu0 0.0
    %434 = vmatprep.subr.mxu0 0.0
    %435 = vmatpush1.msra.mxu0 0.0
    %436 = vmatprep.subr.mxu0 0.0
    %437 = vmatpush1.msra.mxu0 0.0
    %438 = vmatprep.subr.mxu0 %v48
    %439 = vmatpush1.msra.mxu0 %v47
    %440 = vmatprep.subr.mxu0 %v46
    %441 = vmatpush1.msra.mxu0 %v45
    %442 = vmatprep.subr.mxu0 0.0
    %443 = vmatpush2.msra.mxu0 0.0
    %444 = vmatprep.subr.mxu0 0.0
    %445 = vmatpush2.msra.mxu0 0.0
    %446 = vmatprep.subr.mxu0 0.0
    %447 = vmatpush2.msra.mxu0 0.0
    %448 = vmatprep.subr.mxu0 0.0
    %449 = vmatpush2.msra.mxu0 0.0
    %450 = vmatprep.subr.mxu0 0.0
    %451 = vmatpush2.msra.mxu0 0.0
    %452 = vmatprep.subr.mxu0 0.0
    %453 = vmatpush2.msra.mxu0 0.0
    %454 = vmatprep.subr.mxu0 0.0
    %455 = vmatpush2.msra.mxu0 0.0
    %456 = vmatprep.subr.mxu0 0.0
    %457 = vmatpush2.msra.mxu0 0.0
    %458 = vmatprep.subr.mxu0 0.0
    %459 = vmatpush2.msra.mxu0 0.0
    %460 = vmatprep.subr.mxu0 0.0
    %461 = vmatpush2.msra.mxu0 0.0
    %462 = vmatprep.subr.mxu0 0.0
    %463 = vmatpush2.msra.mxu0 0.0
    %464 = vmatprep.subr.mxu0 0.0
    %465 = vmatpush2.msra.mxu0 0.0
    %466 = vmatprep.subr.mxu0 0.0
    %467 = vmatpush2.msra.mxu0 0.0
    %468 = vmatprep.subr.mxu0 0.0
    %469 = vmatpush2.msra.mxu0 0.0
    %470 = vmatprep.subr.mxu0 0.0
    %471 = vmatpush2.msra.mxu0 0.0
    %472 = vmatprep.subr.mxu0 0.0
    %473 = vmatpush2.msra.mxu0 0.0
    %474 = vmatprep.mubr.f32.mxu0 0.0
    %475 = vmatmul.mubr.f32.gmra.mxu0 %v408
    %v476 = vpop.f32.mrf.mxu0
    %v477 = vadd.f32 %v405, %v476
    %v478 = vpop.f32.mrf.mxu0
    %v479 = vadd.f32 %v405, %v478
    %480 = vdwg.mxu0
    %v481 = vmax.f32 %v477, 0.0
    %v482 = vmax.f32 %v479, 0.0
    %v483 = vld [vmem:[%s11] sm:$0xff]
    %v484 = vld [vmem:[%s11 + $0x8] sm:$0xff]
    %486 = vset.pattern.permute.xlu0 0
    %487 = vperm.xlu0 %486, %v398
    %v488 = vpop.permute.xlu0 %487
    %491 = vset.pattern.permute.xlu0 0
    %492 = vperm.xlu0 %491, %v399
    %v493 = vpop.permute.xlu0 %492
    %v496 = vsel %vm144, %v483, 0
    %v499 = vsel %vm144, %v484, 0
    %v502 = vsel %vm151, %v481, 0
    %v505 = vsel %vm151, %v482, 0
    %507 = vmatprep.subr.mxu0 0.0
    %508 = vmatpush1.msra.mxu0 0.0
    %509 = vmatprep.subr.mxu0 0.0
    %510 = vmatpush1.msra.mxu0 0.0
    %511 = vmatprep.subr.mxu0 0.0
    %512 = vmatpush1.msra.mxu0 0.0
    %513 = vmatprep.subr.mxu0 0.0
    %514 = vmatpush1.msra.mxu0 0.0
    %515 = vmatprep.subr.mxu0 0.0
    %516 = vmatpush1.msra.mxu0 0.0
    %517 = vmatprep.subr.mxu0 0.0
    %518 = vmatpush1.msra.mxu0 0.0
    %519 = vmatprep.subr.mxu0 0.0
    %520 = vmatpush1.msra.mxu0 0.0
    %521 = vmatprep.subr.mxu0 0.0
    %522 = vmatpush1.msra.mxu0 0.0
    %523 = vmatprep.subr.mxu0 0.0
    %524 = vmatpush1.msra.mxu0 0.0
    %525 = vmatprep.subr.mxu0 0.0
    %526 = vmatpush1.msra.mxu0 0.0
    %527 = vmatprep.subr.mxu0 0.0
    %528 = vmatpush1.msra.mxu0 0.0
    %529 = vmatprep.subr.mxu0 0.0
    %530 = vmatpush1.msra.mxu0 0.0
    %531 = vmatprep.subr.mxu0 0.0
    %532 = vmatpush1.msra.mxu0 0.0
    %533 = vmatprep.subr.mxu0 0.0
    %534 = vmatpush1.msra.mxu0 0.0
    %535 = vmatprep.subr.mxu0 0.0
    %536 = vmatpush1.msra.mxu0 0.0
    %537 = vmatprep.subr.mxu0 %v505
    %538 = vmatpush1.msra.mxu0 %v502
    %539 = vmatprep.subr.mxu0 0.0
    %540 = vmatpush2.msra.mxu0 0.0
    %541 = vmatprep.subr.mxu0 0.0
    %542 = vmatpush2.msra.mxu0 0.0
    %543 = vmatprep.subr.mxu0 0.0
    %544 = vmatpush2.msra.mxu0 0.0
    %545 = vmatprep.subr.mxu0 0.0
    %546 = vmatpush2.msra.mxu0 0.0
    %547 = vmatprep.subr.mxu0 0.0
    %548 = vmatpush2.msra.mxu0 0.0
    %549 = vmatprep.subr.mxu0 0.0
    %550 = vmatpush2.msra.mxu0 0.0
    %551 = vmatprep.subr.mxu0 0.0
    %552 = vmatpush2.msra.mxu0 0.0
    %553 = vmatprep.subr.mxu0 0.0
    %554 = vmatpush2.msra.mxu0 0.0
    %555 = vmatprep.subr.mxu0 0.0
    %556 = vmatpush2.msra.mxu0 0.0
    %557 = vmatprep.subr.mxu0 0.0
    %558 = vmatpush2.msra.mxu0 0.0
    %559 = vmatprep.subr.mxu0 0.0
    %560 = vmatpush2.msra.mxu0 0.0
    %561 = vmatprep.subr.mxu0 0.0
    %562 = vmatpush2.msra.mxu0 0.0
    %563 = vmatprep.subr.mxu0 0.0
    %564 = vmatpush2.msra.mxu0 0.0
    %565 = vmatprep.subr.mxu0 0.0
    %566 = vmatpush2.msra.mxu0 0.0
    %567 = vmatprep.subr.mxu0 0.0
    %568 = vmatpush2.msra.mxu0 0.0
    %569 = vmatprep.subr.mxu0 0.0
    %570 = vmatpush2.msra.mxu0 0.0
    %571 = vmatprep.mubr.f32.mxu0 0.0
    %572 = vmatmul.mubr.f32.gmra.mxu0 %v496
    %v573 = vpop.f32.mrf.mxu0
    %v574 = vadd.f32 %v488, %v573
    %v575 = vpop.f32.mrf.mxu0
    %v576 = vadd.f32 %v488, %v575
    %577 = vmatprep.mubr.f32.mxu0 0.0
    %578 = vmatmul.mubr.f32.gmra.mxu0 %v499
    %v579 = vpop.f32.mrf.mxu0
    %v580 = vadd.f32 %v493, %v579
    %v581 = vpop.f32.mrf.mxu0
    %v582 = vadd.f32 %v493, %v581
    %583 = vdwg.mxu0
    %v584 = vxor.u32 %v574, 2147483648
    %v585 = vxor.u32 %v576, 2147483648
    %v586 = vxor.u32 %v580, 2147483648
    %v587 = vxor.u32 %v582, 2147483648
    %v588 = vmul.f32 %v584, 1.442695
    %v589 = vpow.pop %v588
    %v590 = vmul.f32 %v585, 1.442695
    %v591 = vpow.pop %v590
    %v592 = vmul.f32 %v586, 1.442695
    %v593 = vpow.pop %v592
    %v594 = vmul.f32 %v587, 1.442695
    %v595 = vpow.pop %v594
    %v596 = vadd.f32 %v589, 1.0
    %v597 = vadd.f32 %v591, 1.0
    %v598 = vadd.f32 %v593, 1.0
    %v599 = vadd.f32 %v595, 1.0
    %v600 = vrcp.pop %v596
    %v601 = vmul.f32 1.0, %v600
    %v602 = vrcp.pop %v597
    %v603 = vmul.f32 1.0, %v602
    %v604 = vrcp.pop %v598
    %v605 = vmul.f32 1.0, %v604
    %v606 = vrcp.pop %v599
    %v607 = vmul.f32 1.0, %v606
    %v608 = vmul.f32 %v45, %v601
    %v609 = vmul.f32 %v46, %v603
    %v610 = vmul.f32 %v47, %v605
    %v611 = vmul.f32 %v48, %v607
    %612 = vst [vmem:[#allocation2] sm:$0xff] %v608
    %613 = vst [vmem:[#allocation2 + $0x8] sm:$0xff] %v609
    %614 = vst [vmem:[#allocation2 + $0x10] sm:$0xff] %v610
    %615 = vst [vmem:[#allocation2 + $0x18] sm:$0xff] %v611
    %s616 = scalar_lea.vmem %s0, 32
    %v617 = vld [vmem:[%s616] sm:$0xff]
    %v618 = vld [vmem:[%s616 + $0x8] sm:$0xff]
    %v619 = vld [vmem:[%s616 + $0x10] sm:$0xff]
    %v620 = vld [vmem:[%s616 + $0x18] sm:$0xff]
    %v621 = vadd.f32 %v617, %v618
    %622 = vadd.xlane.f32.xlu0 %v621
    %v623 = vpop.xlane.xlu0 %622
    %v624 = vadd.f32 %v619, %v620
    %625 = vadd.xlane.f32.xlu0 %v624
    %v626 = vpop.xlane.xlu0 %625
    %v627 = vmul.f32 %v623, 0.00390625
    %v628 = vmul.f32 %v626, 0.00390625
    %v629 = vmax.f32 %v617, %v618
    %630 = vmax.xlane.f32.xlu0 %v629
    %v631 = vpop.xlane.xlu0 %630
    %v632 = vmax.f32 %v619, %v620
    %633 = vmax.xlane.f32.xlu0 %v632
    %v634 = vpop.xlane.xlu0 %633
    %v635 = vld [vmem:[%s1] sm:$0xf]
    %v636 = vld [vmem:[%s2] sm:$0xf]
    %v637 = vld [vmem:[%s3] sm:$0xff]
    %v638 = vld [vmem:[%s3 + $0x8] sm:$0xff]
    %v639 = vld [vmem:[%s4] sm:$0xff]
    %v640 = vld [vmem:[%s4 + $0x8] sm:$0xff]
    %v642 = vsel %vm69, %v635, 0
    %644 = vmatprep.subr.mxu0 0.0
    %645 = vmatpush1.msra.mxu0 0.0
    %646 = vmatprep.subr.mxu0 0.0
    %647 = vmatpush1.msra.mxu0 0.0
    %648 = vmatprep.subr.mxu0 0.0
    %649 = vmatpush1.msra.mxu0 0.0
    %650 = vmatprep.subr.mxu0 0.0
    %651 = vmatpush1.msra.mxu0 0.0
    %652 = vmatprep.subr.mxu0 0.0
    %653 = vmatpush1.msra.mxu0 0.0
    %654 = vmatprep.subr.mxu0 0.0
    %655 = vmatpush1.msra.mxu0 0.0
    %656 = vmatprep.subr.mxu0 0.0
    %657 = vmatpush1.msra.mxu0 0.0
    %658 = vmatprep.subr.mxu0 0.0
    %659 = vmatpush1.msra.mxu0 0.0
    %660 = vmatprep.subr.mxu0 0.0
    %661 = vmatpush1.msra.mxu0 0.0
    %662 = vmatprep.subr.mxu0 0.0
    %663 = vmatpush1.msra.mxu0 0.0
    %664 = vmatprep.subr.mxu0 0.0
    %665 = vmatpush1.msra.mxu0 0.0
    %666 = vmatprep.subr.mxu0 0.0
    %667 = vmatpush1.msra.mxu0 0.0
    %668 = vmatprep.subr.mxu0 0.0
    %669 = vmatpush1.msra.mxu0 0.0
    %670 = vmatprep.subr.mxu0 0.0
    %671 = vmatpush1.msra.mxu0 0.0
    %672 = vmatprep.subr.mxu0 0.0
    %673 = vmatpush1.msra.mxu0 %v628
    %674 = vmatprep.subr.mxu0 0.0
    %675 = vmatpush1.msra.mxu0 %v627
    %676 = vmatprep.subr.mxu0 0.0
    %677 = vmatpush2.msra.mxu0 0.0
    %678 = vmatprep.subr.mxu0 0.0
    %679 = vmatpush2.msra.mxu0 0.0
    %680 = vmatprep.subr.mxu0 0.0
    %681 = vmatpush2.msra.mxu0 0.0
    %682 = vmatprep.subr.mxu0 0.0
    %683 = vmatpush2.msra.mxu0 0.0
    %684 = vmatprep.subr.mxu0 0.0
    %685 = vmatpush2.msra.mxu0 0.0
    %686 = vmatprep.subr.mxu0 0.0
    %687 = vmatpush2.msra.mxu0 0.0
    %688 = vmatprep.subr.mxu0 0.0
    %689 = vmatpush2.msra.mxu0 0.0
    %690 = vmatprep.subr.mxu0 0.0
    %691 = vmatpush2.msra.mxu0 0.0
    %692 = vmatprep.subr.mxu0 0.0
    %693 = vmatpush2.msra.mxu0 0.0
    %694 = vmatprep.subr.mxu0 0.0
    %695 = vmatpush2.msra.mxu0 0.0
    %696 = vmatprep.subr.mxu0 0.0
    %697 = vmatpush2.msra.mxu0 0.0
    %698 = vmatprep.subr.mxu0 0.0
    %699 = vmatpush2.msra.mxu0 0.0
    %700 = vmatprep.subr.mxu0 0.0
    %701 = vmatpush2.msra.mxu0 0.0
    %702 = vmatprep.subr.mxu0 0.0
    %703 = vmatpush2.msra.mxu0 0.0
    %704 = vmatprep.subr.mxu0 0.0
    %705 = vmatpush2.msra.mxu0 0.0
    %706 = vmatprep.subr.mxu0 0.0
    %707 = vmatpush2.msra.mxu0 0.0
    %708 = vmatprep.mubr.f32.mxu0 0.0
    %709 = vmatmul.mubr.f32.gmra.mxu0 %v642
    %v710 = vpop.f32.mrf.mxu0
    %v711 = vadd.f32 %v636, %v710
    %v712 = vpop.f32.mrf.mxu0
    %713 = vdwg.mxu0
    %v714 = vmax.f32 %v711, 0.0
    %v716 = vsel %vm144, %v637, 0
    %v719 = vsel %vm144, %v638, 0
    %v722 = vsel %vm151, %v714, 0
    %724 = vmatprep.subr.mxu0 0.0
    %725 = vmatpush1.msra.mxu0 0.0
    %726 = vmatprep.subr.mxu0 0.0
    %727 = vmatpush1.msra.mxu0 0.0
    %728 = vmatprep.subr.mxu0 0.0
    %729 = vmatpush1.msra.mxu0 0.0
    %730 = vmatprep.subr.mxu0 0.0
    %731 = vmatpush1.msra.mxu0 0.0
    %732 = vmatprep.subr.mxu0 0.0
    %733 = vmatpush1.msra.mxu0 0.0
    %734 = vmatprep.subr.mxu0 0.0
    %735 = vmatpush1.msra.mxu0 0.0
    %736 = vmatprep.subr.mxu0 0.0
    %737 = vmatpush1.msra.mxu0 0.0
    %738 = vmatprep.subr.mxu0 0.0
    %739 = vmatpush1.msra.mxu0 0.0
    %740 = vmatprep.subr.mxu0 0.0
    %741 = vmatpush1.msra.mxu0 0.0
    %742 = vmatprep.subr.mxu0 0.0
    %743 = vmatpush1.msra.mxu0 0.0
    %744 = vmatprep.subr.mxu0 0.0
    %745 = vmatpush1.msra.mxu0 0.0
    %746 = vmatprep.subr.mxu0 0.0
    %747 = vmatpush1.msra.mxu0 0.0
    %748 = vmatprep.subr.mxu0 0.0
    %749 = vmatpush1.msra.mxu0 0.0
    %750 = vmatprep.subr.mxu0 0.0
    %751 = vmatpush1.msra.mxu0 0.0
    %752 = vmatprep.subr.mxu0 0.0
    %753 = vmatpush1.msra.mxu0 0.0
    %754 = vmatprep.subr.mxu0 0.0
    %755 = vmatpush1.msra.mxu0 %v722
    %756 = vmatprep.subr.mxu0 0.0
    %757 = vmatpush2.msra.mxu0 0.0
    %758 = vmatprep.subr.mxu0 0.0
    %759 = vmatpush2.msra.mxu0 0.0
    %760 = vmatprep.subr.mxu0 0.0
    %761 = vmatpush2.msra.mxu0 0.0
    %762 = vmatprep.subr.mxu0 0.0
    %763 = vmatpush2.msra.mxu0 0.0
    %764 = vmatprep.subr.mxu0 0.0
    %765 = vmatpush2.msra.mxu0 0.0
    %766 = vmatprep.subr.mxu0 0.0
    %767 = vmatpush2.msra.mxu0 0.0
    %768 = vmatprep.subr.mxu0 0.0
    %769 = vmatpush2.msra.mxu0 0.0
    %770 = vmatprep.subr.mxu0 0.0
    %771 = vmatpush2.msra.mxu0 0.0
    %772 = vmatprep.subr.mxu0 0.0
    %773 = vmatpush2.msra.mxu0 0.0
    %774 = vmatprep.subr.mxu0 0.0
    %775 = vmatpush2.msra.mxu0 0.0
    %776 = vmatprep.subr.mxu0 0.0
    %777 = vmatpush2.msra.mxu0 0.0
    %778 = vmatprep.subr.mxu0 0.0
    %779 = vmatpush2.msra.mxu0 0.0
    %780 = vmatprep.subr.mxu0 0.0
    %781 = vmatpush2.msra.mxu0 0.0
    %782 = vmatprep.subr.mxu0 0.0
    %783 = vmatpush2.msra.mxu0 0.0
    %784 = vmatprep.subr.mxu0 0.0
    %785 = vmatpush2.msra.mxu0 0.0
    %786 = vmatprep.subr.mxu0 0.0
    %787 = vmatpush2.msra.mxu0 0.0
    %788 = vmatprep.mubr.f32.mxu0 0.0
    %789 = vmatmul.mubr.f32.gmra.mxu0 %v716
    %v790 = vpop.f32.mrf.mxu0
    %v791 = vadd.f32 %v639, %v790
    %v792 = vpop.f32.mrf.mxu0
    %793 = vmatprep.mubr.f32.mxu0 0.0
    %794 = vmatmul.mubr.f32.gmra.mxu0 %v719
    %v795 = vpop.f32.mrf.mxu0
    %v796 = vadd.f32 %v640, %v795
    %v797 = vpop.f32.mrf.mxu0
    %798 = vdwg.mxu0
    %v799 = vld [vmem:[%s5] sm:$0xf]
    %v800 = vld [vmem:[%s6] sm:$0xf]
    %v801 = vld [vmem:[%s7] sm:$0xff]
    %v802 = vld [vmem:[%s7 + $0x8] sm:$0xff]
    %v803 = vld [vmem:[%s8] sm:$0xff]
    %v804 = vld [vmem:[%s8 + $0x8] sm:$0xff]
    %v806 = vsel %vm69, %v799, 0
    %808 = vmatprep.subr.mxu0 0.0
    %809 = vmatpush1.msra.mxu0 0.0
    %810 = vmatprep.subr.mxu0 0.0
    %811 = vmatpush1.msra.mxu0 0.0
    %812 = vmatprep.subr.mxu0 0.0
    %813 = vmatpush1.msra.mxu0 0.0
    %814 = vmatprep.subr.mxu0 0.0
    %815 = vmatpush1.msra.mxu0 0.0
    %816 = vmatprep.subr.mxu0 0.0
    %817 = vmatpush1.msra.mxu0 0.0
    %818 = vmatprep.subr.mxu0 0.0
    %819 = vmatpush1.msra.mxu0 0.0
    %820 = vmatprep.subr.mxu0 0.0
    %821 = vmatpush1.msra.mxu0 0.0
    %822 = vmatprep.subr.mxu0 0.0
    %823 = vmatpush1.msra.mxu0 0.0
    %824 = vmatprep.subr.mxu0 0.0
    %825 = vmatpush1.msra.mxu0 0.0
    %826 = vmatprep.subr.mxu0 0.0
    %827 = vmatpush1.msra.mxu0 0.0
    %828 = vmatprep.subr.mxu0 0.0
    %829 = vmatpush1.msra.mxu0 0.0
    %830 = vmatprep.subr.mxu0 0.0
    %831 = vmatpush1.msra.mxu0 0.0
    %832 = vmatprep.subr.mxu0 0.0
    %833 = vmatpush1.msra.mxu0 0.0
    %834 = vmatprep.subr.mxu0 0.0
    %835 = vmatpush1.msra.mxu0 0.0
    %836 = vmatprep.subr.mxu0 0.0
    %837 = vmatpush1.msra.mxu0 %v634
    %838 = vmatprep.subr.mxu0 0.0
    %839 = vmatpush1.msra.mxu0 %v631
    %840 = vmatprep.subr.mxu0 0.0
    %841 = vmatpush2.msra.mxu0 0.0
    %842 = vmatprep.subr.mxu0 0.0
    %843 = vmatpush2.msra.mxu0 0.0
    %844 = vmatprep.subr.mxu0 0.0
    %845 = vmatpush2.msra.mxu0 0.0
    %846 = vmatprep.subr.mxu0 0.0
    %847 = vmatpush2.msra.mxu0 0.0
    %848 = vmatprep.subr.mxu0 0.0
    %849 = vmatpush2.msra.mxu0 0.0
    %850 = vmatprep.subr.mxu0 0.0
    %851 = vmatpush2.msra.mxu0 0.0
    %852 = vmatprep.subr.mxu0 0.0
    %853 = vmatpush2.msra.mxu0 0.0
    %854 = vmatprep.subr.mxu0 0.0
    %855 = vmatpush2.msra.mxu0 0.0
    %856 = vmatprep.subr.mxu0 0.0
    %857 = vmatpush2.msra.mxu0 0.0
    %858 = vmatprep.subr.mxu0 0.0
    %859 = vmatpush2.msra.mxu0 0.0
    %860 = vmatprep.subr.mxu0 0.0
    %861 = vmatpush2.msra.mxu0 0.0
    %862 = vmatprep.subr.mxu0 0.0
    %863 = vmatpush2.msra.mxu0 0.0
    %864 = vmatprep.subr.mxu0 0.0
    %865 = vmatpush2.msra.mxu0 0.0
    %866 = vmatprep.subr.mxu0 0.0
    %867 = vmatpush2.msra.mxu0 0.0
    %868 = vmatprep.subr.mxu0 0.0
    %869 = vmatpush2.msra.mxu0 0.0
    %870 = vmatprep.subr.mxu0 0.0
    %871 = vmatpush2.msra.mxu0 0.0
    %872 = vmatprep.mubr.f32.mxu0 0.0
    %873 = vmatmul.mubr.f32.gmra.mxu0 %v806
    %v874 = vpop.f32.mrf.mxu0
    %v875 = vadd.f32 %v800, %v874
    %v876 = vpop.f32.mrf.mxu0
    %877 = vdwg.mxu0
    %v878 = vmax.f32 %v875, 0.0
    %v880 = vsel %vm144, %v801, 0
    %v883 = vsel %vm144, %v802, 0
    %v886 = vsel %vm151, %v878, 0
    %888 = vmatprep.subr.mxu0 0.0
    %889 = vmatpush1.msra.mxu0 0.0
    %890 = vmatprep.subr.mxu0 0.0
    %891 = vmatpush1.msra.mxu0 0.0
    %892 = vmatprep.subr.mxu0 0.0
    %893 = vmatpush1.msra.mxu0 0.0
    %894 = vmatprep.subr.mxu0 0.0
    %895 = vmatpush1.msra.mxu0 0.0
    %896 = vmatprep.subr.mxu0 0.0
    %897 = vmatpush1.msra.mxu0 0.0
    %898 = vmatprep.subr.mxu0 0.0
    %899 = vmatpush1.msra.mxu0 0.0
    %900 = vmatprep.subr.mxu0 0.0
    %901 = vmatpush1.msra.mxu0 0.0
    %902 = vmatprep.subr.mxu0 0.0
    %903 = vmatpush1.msra.mxu0 0.0
    %904 = vmatprep.subr.mxu0 0.0
    %905 = vmatpush1.msra.mxu0 0.0
    %906 = vmatprep.subr.mxu0 0.0
    %907 = vmatpush1.msra.mxu0 0.0
    %908 = vmatprep.subr.mxu0 0.0
    %909 = vmatpush1.msra.mxu0 0.0
    %910 = vmatprep.subr.mxu0 0.0
    %911 = vmatpush1.msra.mxu0 0.0
    %912 = vmatprep.subr.mxu0 0.0
    %913 = vmatpush1.msra.mxu0 0.0
    %914 = vmatprep.subr.mxu0 0.0
    %915 = vmatpush1.msra.mxu0 0.0
    %916 = vmatprep.subr.mxu0 0.0
    %917 = vmatpush1.msra.mxu0 0.0
    %918 = vmatprep.subr.mxu0 0.0
    %919 = vmatpush1.msra.mxu0 %v886
    %920 = vmatprep.subr.mxu0 0.0
    %921 = vmatpush2.msra.mxu0 0.0
    %922 = vmatprep.subr.mxu0 0.0
    %923 = vmatpush2.msra.mxu0 0.0
    %924 = vmatprep.subr.mxu0 0.0
    %925 = vmatpush2.msra.mxu0 0.0
    %926 = vmatprep.subr.mxu0 0.0
    %927 = vmatpush2.msra.mxu0 0.0
    %928 = vmatprep.subr.mxu0 0.0
    %929 = vmatpush2.msra.mxu0 0.0
    %930 = vmatprep.subr.mxu0 0.0
    %931 = vmatpush2.msra.mxu0 0.0
    %932 = vmatprep.subr.mxu0 0.0
    %933 = vmatpush2.msra.mxu0 0.0
    %934 = vmatprep.subr.mxu0 0.0
    %935 = vmatpush2.msra.mxu0 0.0
    %936 = vmatprep.subr.mxu0 0.0
    %937 = vmatpush2.msra.mxu0 0.0
    %938 = vmatprep.subr.mxu0 0.0
    %939 = vmatpush2.msra.mxu0 0.0
    %940 = vmatprep.subr.mxu0 0.0
    %941 = vmatpush2.msra.mxu0 0.0
    %942 = vmatprep.subr.mxu0 0.0
    %943 = vmatpush2.msra.mxu0 0.0
    %944 = vmatprep.subr.mxu0 0.0
    %945 = vmatpush2.msra.mxu0 0.0
    %946 = vmatprep.subr.mxu0 0.0
    %947 = vmatpush2.msra.mxu0 0.0
    %948 = vmatprep.subr.mxu0 0.0
    %949 = vmatpush2.msra.mxu0 0.0
    %950 = vmatprep.subr.mxu0 0.0
    %951 = vmatpush2.msra.mxu0 0.0
    %952 = vmatprep.mubr.f32.mxu0 0.0
    %953 = vmatmul.mubr.f32.gmra.mxu0 %v880
    %v954 = vpop.f32.mrf.mxu0
    %v955 = vadd.f32 %v803, %v954
    %v956 = vpop.f32.mrf.mxu0
    %957 = vmatprep.mubr.f32.mxu0 0.0
    %958 = vmatmul.mubr.f32.gmra.mxu0 %v883
    %v959 = vpop.f32.mrf.mxu0
    %v960 = vadd.f32 %v804, %v959
    %v961 = vpop.f32.mrf.mxu0
    %962 = vdwg.mxu0
    %v963 = vadd.f32 %v791, %v955
    %v964 = vadd.f32 %v796, %v960
    %v965 = vld [vmem:[%s12] sm:$0xff]
    %v966 = vld [vmem:[%s12 + $0x8] sm:$0xff]
    %v967 = vadd.f32 %v963, %v965
    %v968 = vadd.f32 %v964, %v966
    %v969 = vld [vmem:[%s9] sm:$0xf]
    %v970 = vld [vmem:[%s10] sm:$0xf]
    %972 = vset.pattern.permute.xlu0 0
    %973 = vperm.xlu0 %972, %v970
    %v974 = vpop.permute.xlu0 %973
    %v977 = vsel %vm69, %v969, 0
    %979 = vmatprep.subr.mxu0 0.0
    %980 = vmatpush1.msra.mxu0 0.0
    %981 = vmatprep.subr.mxu0 0.0
    %982 = vmatpush1.msra.mxu0 0.0
    %983 = vmatprep.subr.mxu0 0.0
    %984 = vmatpush1.msra.mxu0 0.0
    %985 = vmatprep.subr.mxu0 0.0
    %986 = vmatpush1.msra.mxu0 0.0
    %987 = vmatprep.subr.mxu0 0.0
    %988 = vmatpush1.msra.mxu0 0.0
    %989 = vmatprep.subr.mxu0 0.0
    %990 = vmatpush1.msra.mxu0 0.0
    %991 = vmatprep.subr.mxu0 0.0
    %992 = vmatpush1.msra.mxu0 0.0
    %993 = vmatprep.subr.mxu0 0.0
    %994 = vmatpush1.msra.mxu0 0.0
    %995 = vmatprep.subr.mxu0 0.0
    %996 = vmatpush1.msra.mxu0 0.0
    %997 = vmatprep.subr.mxu0 0.0
    %998 = vmatpush1.msra.mxu0 0.0
    %999 = vmatprep.subr.mxu0 0.0
    %1000 = vmatpush1.msra.mxu0 0.0
    %1001 = vmatprep.subr.mxu0 0.0
    %1002 = vmatpush1.msra.mxu0 0.0
    %1003 = vmatprep.subr.mxu0 0.0
    %1004 = vmatpush1.msra.mxu0 0.0
    %1005 = vmatprep.subr.mxu0 0.0
    %1006 = vmatpush1.msra.mxu0 0.0
    %1007 = vmatprep.subr.mxu0 %v620
    %1008 = vmatpush1.msra.mxu0 %v619
    %1009 = vmatprep.subr.mxu0 %v618
    %1010 = vmatpush1.msra.mxu0 %v617
    %1011 = vmatprep.subr.mxu0 0.0
    %1012 = vmatpush2.msra.mxu0 0.0
    %1013 = vmatprep.subr.mxu0 0.0
    %1014 = vmatpush2.msra.mxu0 0.0
    %1015 = vmatprep.subr.mxu0 0.0
    %1016 = vmatpush2.msra.mxu0 0.0
    %1017 = vmatprep.subr.mxu0 0.0
    %1018 = vmatpush2.msra.mxu0 0.0
    %1019 = vmatprep.subr.mxu0 0.0
    %1020 = vmatpush2.msra.mxu0 0.0
    %1021 = vmatprep.subr.mxu0 0.0
    %1022 = vmatpush2.msra.mxu0 0.0
    %1023 = vmatprep.subr.mxu0 0.0
    %1024 = vmatpush2.msra.mxu0 0.0
    %1025 = vmatprep.subr.mxu0 0.0
    %1026 = vmatpush2.msra.mxu0 0.0
    %1027 = vmatprep.subr.mxu0 0.0
    %1028 = vmatpush2.msra.mxu0 0.0
    %1029 = vmatprep.subr.mxu0 0.0
    %1030 = vmatpush2.msra.mxu0 0.0
    %1031 = vmatprep.subr.mxu0 0.0
    %1032 = vmatpush2.msra.mxu0 0.0
    %1033 = vmatprep.subr.mxu0 0.0
    %1034 = vmatpush2.msra.mxu0 0.0
    %1035 = vmatprep.subr.mxu0 0.0
    %1036 = vmatpush2.msra.mxu0 0.0
    %1037 = vmatprep.subr.mxu0 0.0
    %1038 = vmatpush2.msra.mxu0 0.0
    %1039 = vmatprep.subr.mxu0 0.0
    %1040 = vmatpush2.msra.mxu0 0.0
    %1041 = vmatprep.subr.mxu0 0.0
    %1042 = vmatpush2.msra.mxu0 0.0
    %1043 = vmatprep.mubr.f32.mxu0 0.0
    %1044 = vmatmul.mubr.f32.gmra.mxu0 %v977
    %v1045 = vpop.f32.mrf.mxu0
    %v1046 = vadd.f32 %v974, %v1045
    %v1047 = vpop.f32.mrf.mxu0
    %v1048 = vadd.f32 %v974, %v1047
    %1049 = vdwg.mxu0
    %v1050 = vmax.f32 %v1046, 0.0
    %v1051 = vmax.f32 %v1048, 0.0
    %v1052 = vld [vmem:[%s11] sm:$0xff]
    %v1053 = vld [vmem:[%s11 + $0x8] sm:$0xff]
    %1055 = vset.pattern.permute.xlu0 0
    %1056 = vperm.xlu0 %1055, %v967
    %v1057 = vpop.permute.xlu0 %1056
    %1060 = vset.pattern.permute.xlu0 0
    %1061 = vperm.xlu0 %1060, %v968
    %v1062 = vpop.permute.xlu0 %1061
    %v1065 = vsel %vm144, %v1052, 0
    %v1068 = vsel %vm144, %v1053, 0
    %v1071 = vsel %vm151, %v1050, 0
    %v1074 = vsel %vm151, %v1051, 0
    %1076 = vmatprep.subr.mxu0 0.0
    %1077 = vmatpush1.msra.mxu0 0.0
    %1078 = vmatprep.subr.mxu0 0.0
    %1079 = vmatpush1.msra.mxu0 0.0
    %1080 = vmatprep.subr.mxu0 0.0
    %1081 = vmatpush1.msra.mxu0 0.0
    %1082 = vmatprep.subr.mxu0 0.0
    %1083 = vmatpush1.msra.mxu0 0.0
    %1084 = vmatprep.subr.mxu0 0.0
    %1085 = vmatpush1.msra.mxu0 0.0
    %1086 = vmatprep.subr.mxu0 0.0
    %1087 = vmatpush1.msra.mxu0 0.0
    %1088 = vmatprep.subr.mxu0 0.0
    %1089 = vmatpush1.msra.mxu0 0.0
    %1090 = vmatprep.subr.mxu0 0.0
    %1091 = vmatpush1.msra.mxu0 0.0
    %1092 = vmatprep.subr.mxu0 0.0
    %1093 = vmatpush1.msra.mxu0 0.0
    %1094 = vmatprep.subr.mxu0 0.0
    %1095 = vmatpush1.msra.mxu0 0.0
    %1096 = vmatprep.subr.mxu0 0.0
    %1097 = vmatpush1.msra.mxu0 0.0
    %1098 = vmatprep.subr.mxu0 0.0
    %1099 = vmatpush1.msra.mxu0 0.0
    %1100 = vmatprep.subr.mxu0 0.0
    %1101 = vmatpush1.msra.mxu0 0.0
    %1102 = vmatprep.subr.mxu0 0.0
    %1103 = vmatpush1.msra.mxu0 0.0
    %1104 = vmatprep.subr.mxu0 0.0
    %1105 = vmatpush1.msra.mxu0 0.0
    %1106 = vmatprep.subr.mxu0 %v1074
    %1107 = vmatpush1.msra.mxu0 %v1071
    %1108 = vmatprep.subr.mxu0 0.0
    %1109 = vmatpush2.msra.mxu0 0.0
    %1110 = vmatprep.subr.mxu0 0.0
    %1111 = vmatpush2.msra.mxu0 0.0
    %1112 = vmatprep.subr.mxu0 0.0
    %1113 = vmatpush2.msra.mxu0 0.0
    %1114 = vmatprep.subr.mxu0 0.0
    %1115 = vmatpush2.msra.mxu0 0.0
    %1116 = vmatprep.subr.mxu0 0.0
    %1117 = vmatpush2.msra.mxu0 0.0
    %1118 = vmatprep.subr.mxu0 0.0
    %1119 = vmatpush2.msra.mxu0 0.0
    %1120 = vmatprep.subr.mxu0 0.0
    %1121 = vmatpush2.msra.mxu0 0.0
    %1122 = vmatprep.subr.mxu0 0.0
    %1123 = vmatpush2.msra.mxu0 0.0
    %1124 = vmatprep.subr.mxu0 0.0
    %1125 = vmatpush2.msra.mxu0 0.0
    %1126 = vmatprep.subr.mxu0 0.0
    %1127 = vmatpush2.msra.mxu0 0.0
    %1128 = vmatprep.subr.mxu0 0.0
    %1129 = vmatpush2.msra.mxu0 0.0
    %1130 = vmatprep.subr.mxu0 0.0
    %1131 = vmatpush2.msra.mxu0 0.0
    %1132 = vmatprep.subr.mxu0 0.0
    %1133 = vmatpush2.msra.mxu0 0.0
    %1134 = vmatprep.subr.mxu0 0.0
    %1135 = vmatpush2.msra.mxu0 0.0
    %1136 = vmatprep.subr.mxu0 0.0
    %1137 = vmatpush2.msra.mxu0 0.0
    %1138 = vmatprep.subr.mxu0 0.0
    %1139 = vmatpush2.msra.mxu0 0.0
    %1140 = vmatprep.mubr.f32.mxu0 0.0
    %1141 = vmatmul.mubr.f32.gmra.mxu0 %v1065
    %v1142 = vpop.f32.mrf.mxu0
    %v1143 = vadd.f32 %v1057, %v1142
    %v1144 = vpop.f32.mrf.mxu0
    %v1145 = vadd.f32 %v1057, %v1144
    %1146 = vmatprep.mubr.f32.mxu0 0.0
    %1147 = vmatmul.mubr.f32.gmra.mxu0 %v1068
    %v1148 = vpop.f32.mrf.mxu0
    %v1149 = vadd.f32 %v1062, %v1148
    %v1150 = vpop.f32.mrf.mxu0
    %v1151 = vadd.f32 %v1062, %v1150
    %1152 = vdwg.mxu0
    %v1153 = vxor.u32 %v1143, 2147483648
    %v1154 = vxor.u32 %v1145, 2147483648
    %v1155 = vxor.u32 %v1149, 2147483648
    %v1156 = vxor.u32 %v1151, 2147483648
    %v1157 = vmul.f32 %v1153, 1.442695
    %v1158 = vpow.pop %v1157
    %v1159 = vmul.f32 %v1154, 1.442695
    %v1160 = vpow.pop %v1159
    %v1161 = vmul.f32 %v1155, 1.442695
    %v1162 = vpow.pop %v1161
    %v1163 = vmul.f32 %v1156, 1.442695
    %v1164 = vpow.pop %v1163
    %v1165 = vadd.f32 %v1158, 1.0
    %v1166 = vadd.f32 %v1160, 1.0
    %v1167 = vadd.f32 %v1162, 1.0
    %v1168 = vadd.f32 %v1164, 1.0
    %v1169 = vrcp.pop %v1165
    %v1170 = vmul.f32 1.0, %v1169
    %v1171 = vrcp.pop %v1166
    %v1172 = vmul.f32 1.0, %v1171
    %v1173 = vrcp.pop %v1167
    %v1174 = vmul.f32 1.0, %v1173
    %v1175 = vrcp.pop %v1168
    %v1176 = vmul.f32 1.0, %v1175
    %v1177 = vmul.f32 %v617, %v1170
    %v1178 = vmul.f32 %v618, %v1172
    %v1179 = vmul.f32 %v619, %v1174
    %v1180 = vmul.f32 %v620, %v1176
    %s1181 = scalar_lea.vmem [#allocation2], 32
    %1182 = vst [vmem:[%s1181] sm:$0xff] %v1177
    %1183 = vst [vmem:[%s1181 + $0x8] sm:$0xff] %v1178
    %1184 = vst [vmem:[%s1181 + $0x10] sm:$0xff] %v1179
    %1185 = vst [vmem:[%s1181 + $0x18] sm:$0xff] %v1180
    // Predicated region
    $region54: #{tpu_custom_call.1} parent=1 // pred_check
      _
    $region55: #{tpu_custom_call.1} parent=1 // pred_check_branch
      %1187 = sbr.rel (0) target = $region57
    $region56: #{tpu_custom_call.1} parent=1 // pred_region
      %s1189 = ssub.s32 1024, 1024
      %1190 = vsyncadd [#allocation3], %s1189
      %s1191 = sshll.u32 [#allocation2], 4
      %s1192 = int_to_ptr.vmem [resolvable:$true] %s1191
      %1197 = dma.vmem_to_hbm [thread:$0]  %s1192, 1024, %s13, [#allocation3], 256, 256, 16
    $region57: #{tpu_custom_call.1} parent=1 // pred_fallthru
      _
    // Predicated region
    $region58: #{tpu_custom_call.1} parent=1 // pred_check
      _
    $region59: #{tpu_custom_call.1} parent=1 // pred_check_branch
      %1199 = sbr.rel (0) target = $region61
    $region60: #{tpu_custom_call.1} parent=1 // pred_region
      %1200 = dma.done [#allocation3], 1024
    $region61: #{tpu_custom_call.1} parent=1 // pred_fallthru
      _
    %1201 = vsyncpa [#allocation3], 1

</llo_original>
